<compile_context>
chip_gen: v7x
topology: tpu7x:2x2x1
jax: 0.10.0
libtpu: 0.0.40
codegen_flags: <defaults>
</compile_context>

<pallas_src>
import functools

import jax
import jax.numpy as jnp
from jax import lax
from jax.experimental import pallas as pl
from jax.experimental.pallas import tpu as pltpu

N_WINDOWS = 19                         # for idx, i in enumerate(range(0, 90 + 1, 5))
WINDOW = 10                            # argsorted[:, i:i+10]
STRIDE = 5
TOP = STRIDE * (N_WINDOWS - 1) + WINDOW  # = 100 sorted columns are ever touched


def _pskd_v13_kernel(out_ref, tgt_ref, sout_ref, stgt_ref, loss_ref, *,
                     alpha, inv_batch, batch, tile_b):
    # ---------------- main PSKD CE on this batch tile ----------------
    # sum(-targets * log_softmax(output)) == rowsum(tgt)*lse - rowsum(tgt*z)
    # (padded rows have tgt == 0 -> contribute exactly 0, no mask needed here)
    out = out_ref[...].astype(jnp.float32)                           # (tile_b, C)
    tgt = tgt_ref[...].astype(jnp.float32)                           # (tile_b, C)
    z = out - jnp.max(out, axis=-1, keepdims=True)
    lse = jnp.log(jnp.sum(jnp.exp(z), axis=-1, keepdims=True))       # (tile_b, 1)
    row_ce = (jnp.sum(tgt, axis=-1, keepdims=True) * lse
              - jnp.sum(tgt * z, axis=-1, keepdims=True))            # (tile_b, 1)
    main_part = jnp.sum(row_ce, keepdims=True)                       # (1, 1)

    # ---------------- 19 overlapping 10-class windows ----------------
    # Sorted top-TOP columns arrive once as lane-dense (TOP, tile_b) slabs;
    # each window is a static sublane slice of the loaded slab (no HBM dup).
    sout = sout_ref[...].astype(jnp.float32)                         # (TOP, tile_b)
    stgt = stgt_ref[...].astype(jnp.float32)                         # (TOP, tile_b)

    win_acc = jnp.zeros((1, tile_b), jnp.float32)
    for w in range(N_WINDOWS):                                       # fully unrolled
        lo = STRIDE * w
        to = stgt[lo:lo + WINDOW, :]                                 # (10, tile_b)
        oo = sout[lo:lo + WINDOW, :]

        texp = jnp.exp(to - jnp.max(to, axis=0, keepdims=True))
        denom = jnp.sum(texp, axis=0, keepdims=True)                 # (1, tile_b)
        p_t = texp * pl.reciprocal(denom, approx=True)               # softmax(sub_tgt)

        oz = oo - jnp.max(oo, axis=0, keepdims=True)
        olse = jnp.log(jnp.sum(jnp.exp(oz), axis=0, keepdims=True))  # (1, tile_b)
        # sum_j -p_j * log_softmax(sub_out)_j == sum_j p_j * (olse - oz_j)
        win_acc = win_acc + jnp.sum(p_t * (olse - oz), axis=0, keepdims=True)

    # Mask padded batch columns: their window term is ~log(10) per window, not 0.
    col = lax.broadcasted_iota(jnp.int32, (1, tile_b), 1) + pl.program_id(0) * tile_b
    win_part = jnp.sum(jnp.where(col < batch, win_acc, 0.0), keepdims=True)

    total = (main_part + alpha * win_part) * inv_batch               # (1, 1)
    # Lane-dense (8, 128) output tile -> single unmasked vreg store per step.
    loss_ref[...] = jnp.broadcast_to(total, (8, 128))


def _vmem_capacity_bytes():
    try:
        return int(pltpu.get_tpu_info().vmem_capacity_bytes)
    except Exception:
        return 64 * 1024 * 1024        # conservative fallback (v7x per-TC size)


def _pick_tile_b(batch, n_classes, in_itemsize, vmem_budget):
    # Resident bytes per batch row: 2 inputs x 2 double-buffers for both the
    # (tile_b, C) logits/targets tiles and the (TOP, tile_b) sorted slabs, plus
    # the in-kernel f32 temporaries (upcasts, exp, products, window scratch).
    per_row = (4 * n_classes * in_itemsize       # double-buffered main input tiles
               + 4 * TOP * in_itemsize           # double-buffered sorted slabs
               + 6 * n_classes * 4               # f32 temps of the main CE
               + 6 * TOP * 4)                    # f32 temps of the window pass
    tile = 128
    for t in (4096, 2048, 1024, 512, 256, 128):
        if t * per_row <= vmem_budget:
            tile = t
            break
    # Prefer >= 2 grid steps when the batch allows it (v7x megacore sharding +
    # DMA/compute double-buffering); halving keeps the tile a multiple of 128.
    b128 = ((batch + 127) // 128) * 128
    while tile > 128 and b128 // tile < 2:
        tile //= 2
    return tile


def pskd_v13_loss(output, targets, alpha):
    B, C = output.shape
    assert C >= TOP, "module slices argsorted[:, i:i+10] for i up to 90 -> needs >= 100 classes"

    vmem_cap = _vmem_capacity_bytes()
    vmem_limit = (vmem_cap * 3) // 4             # ~48 MiB on v7x, ~96 MiB on v5e/v6e
    tile_b = _pick_tile_b(B, C, output.dtype.itemsize, int(vmem_limit * 0.85))
    num_tiles = -(-B // tile_b)                  # cdiv
    b_pad = num_tiles * tile_b

    if b_pad != B:
        output_p = jnp.pad(output, ((0, b_pad - B), (0, 0)))
        targets_p = jnp.pad(targets, ((0, b_pad - B), (0, 0)))
    else:
        output_p, targets_p = output, targets

    # TODO(synk): the descending class sort has no clean Pallas TPU primitive;
    # it stays in plain JAX (tie-breaking may differ from torch for tied targets).
    # One fused multi-operand sort carries the logits along with the negated
    # targets key; only the top-TOP columns are kept and transposed once into a
    # lane-dense (TOP, B) layout for the kernel.
    neg_sorted_tgt, sorted_out = lax.sort((-targets_p, output_p), dimension=1, num_keys=1)
    slab_tgt = jnp.transpose(-neg_sorted_tgt[:, :TOP])      # (TOP, b_pad)
    slab_out = jnp.transpose(sorted_out[:, :TOP])           # (TOP, b_pad)

    kernel = functools.partial(
        _pskd_v13_kernel, alpha=float(alpha), inv_batch=1.0 / float(B),
        batch=B, tile_b=tile_b)

    partials = pl.pallas_call(
        kernel,
        out_shape=jax.ShapeDtypeStruct((num_tiles * 8, 128), jnp.float32),
        grid=(num_tiles,),
        in_specs=[
            pl.BlockSpec((tile_b, C), lambda i: (i, 0)),
            pl.BlockSpec((tile_b, C), lambda i: (i, 0)),
            pl.BlockSpec((TOP, tile_b), lambda i: (0, i)),
            pl.BlockSpec((TOP, tile_b), lambda i: (0, i)),
        ],
        out_specs=pl.BlockSpec((8, 128), lambda i: (i, 0)),
        compiler_params=pltpu.CompilerParams(
            dimension_semantics=("parallel",),   # independent batch tiles -> both TCs on v7x
            vmem_limit_bytes=int(vmem_limit)),
    )(output_p, targets_p, slab_out, slab_tgt)

    # Tiny final reduce in JAX over the per-tile partial losses.
    return jnp.sum(partials[::8, 0])


def _reference(output, targets, alpha):
    output = output.astype(jnp.float32)
    targets = targets.astype(jnp.float32)
    logp = jax.nn.log_softmax(output, axis=1)
    loss = jnp.sum(jnp.mean(-targets * logp, axis=0))
    order = jnp.argsort(targets, axis=1, descending=True)
    for i in range(0, 90 + 1, 5):
        idx = order[:, i:i + WINDOW]
        sub_out = jnp.take_along_axis(output, idx, axis=1)
        sub_tgt = jax.nn.softmax(jnp.take_along_axis(targets, idx, axis=1), axis=1)
        sub_loss = jnp.sum(jnp.mean(-sub_tgt * jax.nn.log_softmax(sub_out, axis=1), axis=0))
        loss = loss + alpha * sub_loss
    return loss


if __name__ == "__main__":
    key = jax.random.PRNGKey(0)
    k1, k2 = jax.random.split(key)

    B, C = 8, 128               # need C >= 100 classes for the 19 windows
    alpha = 0.5                 # deterministic module hyper-parameter

    output = jax.random.normal(k1, (B, C), dtype=jnp.float32)        # logits
    # "targets": softmax of previous-epoch logits mixed with hard labels
    prev_logits = jax.random.normal(k2, (B, C), dtype=jnp.float32)
    soft = jax.nn.softmax(prev_logits, axis=1)
    hard = jax.nn.one_hot(jnp.arange(B) % C, C, dtype=jnp.float32)
    targets = 0.7 * soft + 0.3 * hard

    loss_fn = jax.jit(pskd_v13_loss, static_argnums=(2,))
    loss = loss_fn(output, targets, alpha)
    jax.block_until_ready(loss)

    ref = _reference(output, targets, alpha)
    assert jnp.allclose(loss, ref, rtol=3e-3, atol=3e-3), (loss, ref)

    print("KERNEL_OK")
</pallas_src>

<mosaic_0001>
module attributes {stable_mosaic.version = 11 : i64} {
  func.func @_pskd_v13_kernel(%arg0: i32, %arg1: memref<128x128xf32, #tpu.memory_space<vmem>>, %arg2: memref<128x128xf32, #tpu.memory_space<vmem>>, %arg3: memref<100x128xf32, #tpu.memory_space<vmem>>, %arg4: memref<100x128xf32, #tpu.memory_space<vmem>>, %arg5: memref<8x128xf32, #tpu.memory_space<vmem>>) attributes {dimension_semantics = [#tpu.dimension_semantics<parallel>], iteration_bounds = array<i64: 1>, scalar_prefetch = 0 : i64, scratch_operands = 0 : i64, tpu.core_type = #tpu.core_type<tc>, window_params = [{transform_indices = @transform_0, window_bounds = array<i64: 128, 128>}, {transform_indices = @transform_1, window_bounds = array<i64: 128, 128>}, {transform_indices = @transform_2, window_bounds = array<i64: 100, 128>}, {transform_indices = @transform_3, window_bounds = array<i64: 100, 128>}, {transform_indices = @transform_4, window_bounds = array<i64: 8, 128>}]} {
    %c0 = arith.constant 0 : index
    %c0_0 = arith.constant 0 : index
    %0 = vector.load %arg1[%c0, %c0_0] : memref<128x128xf32, #tpu.memory_space<vmem>>, vector<128x128xf32>
    %c0_1 = arith.constant 0 : index
    %c0_2 = arith.constant 0 : index
    %1 = vector.load %arg2[%c0_1, %c0_2] : memref<128x128xf32, #tpu.memory_space<vmem>>, vector<128x128xf32>
    %cst = arith.constant dense<0xFF800000> : vector<128xf32>
    %2 = vector.multi_reduction <maximumf>, %0, %cst [1] : vector<128x128xf32> to vector<128xf32>
    %3 = vector.shape_cast %2 : vector<128xf32> to vector<128x1xf32>
    %4 = vector.broadcast %3 : vector<128x1xf32> to vector<128x128xf32>
    %5 = arith.subf %0, %4 : vector<128x128xf32>
    %6 = math.exp %5 : vector<128x128xf32>
    %cst_3 = arith.constant dense<0.000000e+00> : vector<128xf32>
    %7 = vector.multi_reduction <add>, %6, %cst_3 [1] : vector<128x128xf32> to vector<128xf32>
    %8 = vector.shape_cast %7 : vector<128xf32> to vector<128x1xf32>
    %9 = math.log %8 : vector<128x1xf32>
    %cst_4 = arith.constant dense<0.000000e+00> : vector<128xf32>
    %10 = vector.multi_reduction <add>, %1, %cst_4 [1] : vector<128x128xf32> to vector<128xf32>
    %11 = vector.shape_cast %10 : vector<128xf32> to vector<128x1xf32>
    %12 = arith.mulf %11, %9 : vector<128x1xf32>
    %13 = arith.mulf %1, %5 : vector<128x128xf32>
    %cst_5 = arith.constant dense<0.000000e+00> : vector<128xf32>
    %14 = vector.multi_reduction <add>, %13, %cst_5 [1] : vector<128x128xf32> to vector<128xf32>
    %15 = vector.shape_cast %14 : vector<128xf32> to vector<128x1xf32>
    %16 = arith.subf %12, %15 : vector<128x1xf32>
    %17 = vector.shape_cast %16 : vector<128x1xf32> to vector<1x128x1xf32>
    %cst_6 = arith.constant dense<0.000000e+00> : vector<1xf32>
    %18 = vector.multi_reduction <add>, %17, %cst_6 [1, 2] : vector<1x128x1xf32> to vector<1xf32>
    %19 = vector.shape_cast %18 : vector<1xf32> to vector<1x1x1xf32>
    %20 = vector.extract %19[0, 0, 0] : f32 from vector<1x1x1xf32>
    %21 = vector.broadcast %20 : f32 to vector<1x1xf32>
    %c0_7 = arith.constant 0 : index
    %c0_8 = arith.constant 0 : index
    %22 = vector.load %arg3[%c0_7, %c0_8] : memref<100x128xf32, #tpu.memory_space<vmem>>, vector<100x128xf32>
    %c0_9 = arith.constant 0 : index
    %c0_10 = arith.constant 0 : index
    %23 = vector.load %arg4[%c0_9, %c0_10] : memref<100x128xf32, #tpu.memory_space<vmem>>, vector<100x128xf32>
    %cst_11 = arith.constant 0.000000e+00 : f32
    %24 = vector.broadcast %cst_11 : f32 to vector<1x128xf32>
    %25 = vector.extract_strided_slice %23 {offsets = [0, 0], sizes = [10, 128], strides = [1, 1]} : vector<100x128xf32> to vector<10x128xf32>
    %26 = vector.extract_strided_slice %22 {offsets = [0, 0], sizes = [10, 128], strides = [1, 1]} : vector<100x128xf32> to vector<10x128xf32>
    %cst_12 = arith.constant dense<0xFF800000> : vector<128xf32>
    %27 = vector.multi_reduction <maximumf>, %25, %cst_12 [0] : vector<10x128xf32> to vector<128xf32>
    %28 = vector.shape_cast %27 : vector<128xf32> to vector<1x128xf32>
    %29 = vector.broadcast %28 : vector<1x128xf32> to vector<10x128xf32>
    %30 = arith.subf %25, %29 : vector<10x128xf32>
    %31 = math.exp %30 : vector<10x128xf32>
    %cst_13 = arith.constant dense<0.000000e+00> : vector<128xf32>
    %32 = vector.multi_reduction <add>, %31, %cst_13 [0] : vector<10x128xf32> to vector<128xf32>
    %33 = vector.shape_cast %32 : vector<128xf32> to vector<1x128xf32>
    %34 = tpu.reciprocal %33 {approx = true} : vector<1x128xf32> -> vector<1x128xf32>
    %35 = vector.broadcast %34 : vector<1x128xf32> to vector<10x128xf32>
    %36 = arith.mulf %31, %35 : vector<10x128xf32>
    %cst_14 = arith.constant dense<0xFF800000> : vector<128xf32>
    %37 = vector.multi_reduction <maximumf>, %26, %cst_14 [0] : vector<10x128xf32> to vector<128xf32>
    %38 = vector.shape_cast %37 : vector<128xf32> to vector<1x128xf32>
    %39 = vector.broadcast %38 : vector<1x128xf32> to vector<10x128xf32>
    %40 = arith.subf %26, %39 : vector<10x128xf32>
    %41 = math.exp %40 : vector<10x128xf32>
    %cst_15 = arith.constant dense<0.000000e+00> : vector<128xf32>
    %42 = vector.multi_reduction <add>, %41, %cst_15 [0] : vector<10x128xf32> to vector<128xf32>
    %43 = vector.shape_cast %42 : vector<128xf32> to vector<1x128xf32>
    %44 = math.log %43 : vector<1x128xf32>
    %45 = vector.broadcast %44 : vector<1x128xf32> to vector<10x128xf32>
    %46 = arith.subf %45, %40 : vector<10x128xf32>
    %47 = arith.mulf %36, %46 : vector<10x128xf32>
    %cst_16 = arith.constant dense<0.000000e+00> : vector<128xf32>
    %48 = vector.multi_reduction <add>, %47, %cst_16 [0] : vector<10x128xf32> to vector<128xf32>
    %49 = vector.shape_cast %48 : vector<128xf32> to vector<1x128xf32>
    %50 = arith.addf %24, %49 : vector<1x128xf32>
    %51 = vector.extract_strided_slice %23 {offsets = [5, 0], sizes = [10, 128], strides = [1, 1]} : vector<100x128xf32> to vector<10x128xf32>
    %52 = vector.extract_strided_slice %22 {offsets = [5, 0], sizes = [10, 128], strides = [1, 1]} : vector<100x128xf32> to vector<10x128xf32>
    %cst_17 = arith.constant dense<0xFF800000> : vector<128xf32>
    %53 = vector.multi_reduction <maximumf>, %51, %cst_17 [0] : vector<10x128xf32> to vector<128xf32>
    %54 = vector.shape_cast %53 : vector<128xf32> to vector<1x128xf32>
    %55 = vector.broadcast %54 : vector<1x128xf32> to vector<10x128xf32>
    %56 = arith.subf %51, %55 : vector<10x128xf32>
    %57 = math.exp %56 : vector<10x128xf32>
    %cst_18 = arith.constant dense<0.000000e+00> : vector<128xf32>
    %58 = vector.multi_reduction <add>, %57, %cst_18 [0] : vector<10x128xf32> to vector<128xf32>
    %59 = vector.shape_cast %58 : vector<128xf32> to vector<1x128xf32>
    %60 = tpu.reciprocal %59 {approx = true} : vector<1x128xf32> -> vector<1x128xf32>
    %61 = vector.broadcast %60 : vector<1x128xf32> to vector<10x128xf32>
    %62 = arith.mulf %57, %61 : vector<10x128xf32>
    %cst_19 = arith.constant dense<0xFF800000> : vector<128xf32>
    %63 = vector.multi_reduction <maximumf>, %52, %cst_19 [0] : vector<10x128xf32> to vector<128xf32>
    %64 = vector.shape_cast %63 : vector<128xf32> to vector<1x128xf32>
    %65 = vector.broadcast %64 : vector<1x128xf32> to vector<10x128xf32>
    %66 = arith.subf %52, %65 : vector<10x128xf32>
    %67 = math.exp %66 : vector<10x128xf32>
    %cst_20 = arith.constant dense<0.000000e+00> : vector<128xf32>
    %68 = vector.multi_reduction <add>, %67, %cst_20 [0] : vector<10x128xf32> to vector<128xf32>
    %69 = vector.shape_cast %68 : vector<128xf32> to vector<1x128xf32>
    %70 = math.log %69 : vector<1x128xf32>
    %71 = vector.broadcast %70 : vector<1x128xf32> to vector<10x128xf32>
    %72 = arith.subf %71, %66 : vector<10x128xf32>
    %73 = arith.mulf %62, %72 : vector<10x128xf32>
    %cst_21 = arith.constant dense<0.000000e+00> : vector<128xf32>
    %74 = vector.multi_reduction <add>, %73, %cst_21 [0] : vector<10x128xf32> to vector<128xf32>
    %75 = vector.shape_cast %74 : vector<128xf32> to vector<1x128xf32>
    %76 = arith.addf %50, %75 : vector<1x128xf32>
    %77 = vector.extract_strided_slice %23 {offsets = [10, 0], sizes = [10, 128], strides = [1, 1]} : vector<100x128xf32> to vector<10x128xf32>
    %78 = vector.extract_strided_slice %22 {offsets = [10, 0], sizes = [10, 128], strides = [1, 1]} : vector<100x128xf32> to vector<10x128xf32>
    %cst_22 = arith.constant dense<0xFF800000> : vector<128xf32>
    %79 = vector.multi_reduction <maximumf>, %77, %cst_22 [0] : vector<10x128xf32> to vector<128xf32>
    %80 = vector.shape_cast %79 : vector<128xf32> to vector<1x128xf32>
    %81 = vector.broadcast %80 : vector<1x128xf32> to vector<10x128xf32>
    %82 = arith.subf %77, %81 : vector<10x128xf32>
    %83 = math.exp %82 : vector<10x128xf32>
    %cst_23 = arith.constant dense<0.000000e+00> : vector<128xf32>
    %84 = vector.multi_reduction <add>, %83, %cst_23 [0] : vector<10x128xf32> to vector<128xf32>
    %85 = vector.shape_cast %84 : vector<128xf32> to vector<1x128xf32>
    %86 = tpu.reciprocal %85 {approx = true} : vector<1x128xf32> -> vector<1x128xf32>
    %87 = vector.broadcast %86 : vector<1x128xf32> to vector<10x128xf32>
    %88 = arith.mulf %83, %87 : vector<10x128xf32>
    %cst_24 = arith.constant dense<0xFF800000> : vector<128xf32>
    %89 = vector.multi_reduction <maximumf>, %78, %cst_24 [0] : vector<10x128xf32> to vector<128xf32>
    %90 = vector.shape_cast %89 : vector<128xf32> to vector<1x128xf32>
    %91 = vector.broadcast %90 : vector<1x128xf32> to vector<10x128xf32>
    %92 = arith.subf %78, %91 : vector<10x128xf32>
    %93 = math.exp %92 : vector<10x128xf32>
    %cst_25 = arith.constant dense<0.000000e+00> : vector<128xf32>
    %94 = vector.multi_reduction <add>, %93, %cst_25 [0] : vector<10x128xf32> to vector<128xf32>
    %95 = vector.shape_cast %94 : vector<128xf32> to vector<1x128xf32>
    %96 = math.log %95 : vector<1x128xf32>
    %97 = vector.broadcast %96 : vector<1x128xf32> to vector<10x128xf32>
    %98 = arith.subf %97, %92 : vector<10x128xf32>
    %99 = arith.mulf %88, %98 : vector<10x128xf32>
    %cst_26 = arith.constant dense<0.000000e+00> : vector<128xf32>
    %100 = vector.multi_reduction <add>, %99, %cst_26 [0] : vector<10x128xf32> to vector<128xf32>
    %101 = vector.shape_cast %100 : vector<128xf32> to vector<1x128xf32>
    %102 = arith.addf %76, %101 : vector<1x128xf32>
    %103 = vector.extract_strided_slice %23 {offsets = [15, 0], sizes = [10, 128], strides = [1, 1]} : vector<100x128xf32> to vector<10x128xf32>
    %104 = vector.extract_strided_slice %22 {offsets = [15, 0], sizes = [10, 128], strides = [1, 1]} : vector<100x128xf32> to vector<10x128xf32>
    %cst_27 = arith.constant dense<0xFF800000> : vector<128xf32>
    %105 = vector.multi_reduction <maximumf>, %103, %cst_27 [0] : vector<10x128xf32> to vector<128xf32>
    %106 = vector.shape_cast %105 : vector<128xf32> to vector<1x128xf32>
    %107 = vector.broadcast %106 : vector<1x128xf32> to vector<10x128xf32>
    %108 = arith.subf %103, %107 : vector<10x128xf32>
    %109 = math.exp %108 : vector<10x128xf32>
    %cst_28 = arith.constant dense<0.000000e+00> : vector<128xf32>
    %110 = vector.multi_reduction <add>, %109, %cst_28 [0] : vector<10x128xf32> to vector<128xf32>
    %111 = vector.shape_cast %110 : vector<128xf32> to vector<1x128xf32>
    %112 = tpu.reciprocal %111 {approx = true} : vector<1x128xf32> -> vector<1x128xf32>
    %113 = vector.broadcast %112 : vector<1x128xf32> to vector<10x128xf32>
    %114 = arith.mulf %109, %113 : vector<10x128xf32>
    %cst_29 = arith.constant dense<0xFF800000> : vector<128xf32>
    %115 = vector.multi_reduction <maximumf>, %104, %cst_29 [0] : vector<10x128xf32> to vector<128xf32>
    %116 = vector.shape_cast %115 : vector<128xf32> to vector<1x128xf32>
    %117 = vector.broadcast %116 : vector<1x128xf32> to vector<10x128xf32>
    %118 = arith.subf %104, %117 : vector<10x128xf32>
    %119 = math.exp %118 : vector<10x128xf32>
    %cst_30 = arith.constant dense<0.000000e+00> : vector<128xf32>
    %120 = vector.multi_reduction <add>, %119, %cst_30 [0] : vector<10x128xf32> to vector<128xf32>
    %121 = vector.shape_cast %120 : vector<128xf32> to vector<1x128xf32>
    %122 = math.log %121 : vector<1x128xf32>
    %123 = vector.broadcast %122 : vector<1x128xf32> to vector<10x128xf32>
    %124 = arith.subf %123, %118 : vector<10x128xf32>
    %125 = arith.mulf %114, %124 : vector<10x128xf32>
    %cst_31 = arith.constant dense<0.000000e+00> : vector<128xf32>
    %126 = vector.multi_reduction <add>, %125, %cst_31 [0] : vector<10x128xf32> to vector<128xf32>
    %127 = vector.shape_cast %126 : vector<128xf32> to vector<1x128xf32>
    %128 = arith.addf %102, %127 : vector<1x128xf32>
    %129 = vector.extract_strided_slice %23 {offsets = [20, 0], sizes = [10, 128], strides = [1, 1]} : vector<100x128xf32> to vector<10x128xf32>
    %130 = vector.extract_strided_slice %22 {offsets = [20, 0], sizes = [10, 128], strides = [1, 1]} : vector<100x128xf32> to vector<10x128xf32>
    %cst_32 = arith.constant dense<0xFF800000> : vector<128xf32>
    %131 = vector.multi_reduction <maximumf>, %129, %cst_32 [0] : vector<10x128xf32> to vector<128xf32>
    %132 = vector.shape_cast %131 : vector<128xf32> to vector<1x128xf32>
    %133 = vector.broadcast %132 : vector<1x128xf32> to vector<10x128xf32>
    %134 = arith.subf %129, %133 : vector<10x128xf32>
    %135 = math.exp %134 : vector<10x128xf32>
    %cst_33 = arith.constant dense<0.000000e+00> : vector<128xf32>
    %136 = vector.multi_reduction <add>, %135, %cst_33 [0] : vector<10x128xf32> to vector<128xf32>
    %137 = vector.shape_cast %136 : vector<128xf32> to vector<1x128xf32>
    %138 = tpu.reciprocal %137 {approx = true} : vector<1x128xf32> -> vector<1x128xf32>
    %139 = vector.broadcast %138 : vector<1x128xf32> to vector<10x128xf32>
    %140 = arith.mulf %135, %139 : vector<10x128xf32>
    %cst_34 = arith.constant dense<0xFF800000> : vector<128xf32>
    %141 = vector.multi_reduction <maximumf>, %130, %cst_34 [0] : vector<10x128xf32> to vector<128xf32>
    %142 = vector.shape_cast %141 : vector<128xf32> to vector<1x128xf32>
    %143 = vector.broadcast %142 : vector<1x128xf32> to vector<10x128xf32>
    %144 = arith.subf %130, %143 : vector<10x128xf32>
    %145 = math.exp %144 : vector<10x128xf32>
    %cst_35 = arith.constant dense<0.000000e+00> : vector<128xf32>
    %146 = vector.multi_reduction <add>, %145, %cst_35 [0] : vector<10x128xf32> to vector<128xf32>
    %147 = vector.shape_cast %146 : vector<128xf32> to vector<1x128xf32>
    %148 = math.log %147 : vector<1x128xf32>
    %149 = vector.broadcast %148 : vector<1x128xf32> to vector<10x128xf32>
    %150 = arith.subf %149, %144 : vector<10x128xf32>
    %151 = arith.mulf %140, %150 : vector<10x128xf32>
    %cst_36 = arith.constant dense<0.000000e+00> : vector<128xf32>
    %152 = vector.multi_reduction <add>, %151, %cst_36 [0] : vector<10x128xf32> to vector<128xf32>
    %153 = vector.shape_cast %152 : vector<128xf32> to vector<1x128xf32>
    %154 = arith.addf %128, %153 : vector<1x128xf32>
    %155 = vector.extract_strided_slice %23 {offsets = [25, 0], sizes = [10, 128], strides = [1, 1]} : vector<100x128xf32> to vector<10x128xf32>
    %156 = vector.extract_strided_slice %22 {offsets = [25, 0], sizes = [10, 128], strides = [1, 1]} : vector<100x128xf32> to vector<10x128xf32>
    %cst_37 = arith.constant dense<0xFF800000> : vector<128xf32>
    %157 = vector.multi_reduction <maximumf>, %155, %cst_37 [0] : vector<10x128xf32> to vector<128xf32>
    %158 = vector.shape_cast %157 : vector<128xf32> to vector<1x128xf32>
    %159 = vector.broadcast %158 : vector<1x128xf32> to vector<10x128xf32>
    %160 = arith.subf %155, %159 : vector<10x128xf32>
    %161 = math.exp %160 : vector<10x128xf32>
    %cst_38 = arith.constant dense<0.000000e+00> : vector<128xf32>
    %162 = vector.multi_reduction <add>, %161, %cst_38 [0] : vector<10x128xf32> to vector<128xf32>
    %163 = vector.shape_cast %162 : vector<128xf32> to vector<1x128xf32>
    %164 = tpu.reciprocal %163 {approx = true} : vector<1x128xf32> -> vector<1x128xf32>
    %165 = vector.broadcast %164 : vector<1x128xf32> to vector<10x128xf32>
    %166 = arith.mulf %161, %165 : vector<10x128xf32>
    %cst_39 = arith.constant dense<0xFF800000> : vector<128xf32>
    %167 = vector.multi_reduction <maximumf>, %156, %cst_39 [0] : vector<10x128xf32> to vector<128xf32>
    %168 = vector.shape_cast %167 : vector<128xf32> to vector<1x128xf32>
    %169 = vector.broadcast %168 : vector<1x128xf32> to vector<10x128xf32>
    %170 = arith.subf %156, %169 : vector<10x128xf32>
    %171 = math.exp %170 : vector<10x128xf32>
    %cst_40 = arith.constant dense<0.000000e+00> : vector<128xf32>
    %172 = vector.multi_reduction <add>, %171, %cst_40 [0] : vector<10x128xf32> to vector<128xf32>
    %173 = vector.shape_cast %172 : vector<128xf32> to vector<1x128xf32>
    %174 = math.log %173 : vector<1x128xf32>
    %175 = vector.broadcast %174 : vector<1x128xf32> to vector<10x128xf32>
    %176 = arith.subf %175, %170 : vector<10x128xf32>
    %177 = arith.mulf %166, %176 : vector<10x128xf32>
    %cst_41 = arith.constant dense<0.000000e+00> : vector<128xf32>
    %178 = vector.multi_reduction <add>, %177, %cst_41 [0] : vector<10x128xf32> to vector<128xf32>
    %179 = vector.shape_cast %178 : vector<128xf32> to vector<1x128xf32>
    %180 = arith.addf %154, %179 : vector<1x128xf32>
    %181 = vector.extract_strided_slice %23 {offsets = [30, 0], sizes = [10, 128], strides = [1, 1]} : vector<100x128xf32> to vector<10x128xf32>
    %182 = vector.extract_strided_slice %22 {offsets = [30, 0], sizes = [10, 128], strides = [1, 1]} : vector<100x128xf32> to vector<10x128xf32>
    %cst_42 = arith.constant dense<0xFF800000> : vector<128xf32>
    %183 = vector.multi_reduction <maximumf>, %181, %cst_42 [0] : vector<10x128xf32> to vector<128xf32>
    %184 = vector.shape_cast %183 : vector<128xf32> to vector<1x128xf32>
    %185 = vector.broadcast %184 : vector<1x128xf32> to vector<10x128xf32>
    %186 = arith.subf %181, %185 : vector<10x128xf32>
    %187 = math.exp %186 : vector<10x128xf32>
    %cst_43 = arith.constant dense<0.000000e+00> : vector<128xf32>
    %188 = vector.multi_reduction <add>, %187, %cst_43 [0] : vector<10x128xf32> to vector<128xf32>
    %189 = vector.shape_cast %188 : vector<128xf32> to vector<1x128xf32>
    %190 = tpu.reciprocal %189 {approx = true} : vector<1x128xf32> -> vector<1x128xf32>
    %191 = vector.broadcast %190 : vector<1x128xf32> to vector<10x128xf32>
    %192 = arith.mulf %187, %191 : vector<10x128xf32>
    %cst_44 = arith.constant dense<0xFF800000> : vector<128xf32>
    %193 = vector.multi_reduction <maximumf>, %182, %cst_44 [0] : vector<10x128xf32> to vector<128xf32>
    %194 = vector.shape_cast %193 : vector<128xf32> to vector<1x128xf32>
    %195 = vector.broadcast %194 : vector<1x128xf32> to vector<10x128xf32>
    %196 = arith.subf %182, %195 : vector<10x128xf32>
    %197 = math.exp %196 : vector<10x128xf32>
    %cst_45 = arith.constant dense<0.000000e+00> : vector<128xf32>
    %198 = vector.multi_reduction <add>, %197, %cst_45 [0] : vector<10x128xf32> to vector<128xf32>
    %199 = vector.shape_cast %198 : vector<128xf32> to vector<1x128xf32>
    %200 = math.log %199 : vector<1x128xf32>
    %201 = vector.broadcast %200 : vector<1x128xf32> to vector<10x128xf32>
    %202 = arith.subf %201, %196 : vector<10x128xf32>
    %203 = arith.mulf %192, %202 : vector<10x128xf32>
    %cst_46 = arith.constant dense<0.000000e+00> : vector<128xf32>
    %204 = vector.multi_reduction <add>, %203, %cst_46 [0] : vector<10x128xf32> to vector<128xf32>
    %205 = vector.shape_cast %204 : vector<128xf32> to vector<1x128xf32>
    %206 = arith.addf %180, %205 : vector<1x128xf32>
    %207 = vector.extract_strided_slice %23 {offsets = [35, 0], sizes = [10, 128], strides = [1, 1]} : vector<100x128xf32> to vector<10x128xf32>
    %208 = vector.extract_strided_slice %22 {offsets = [35, 0], sizes = [10, 128], strides = [1, 1]} : vector<100x128xf32> to vector<10x128xf32>
    %cst_47 = arith.constant dense<0xFF800000> : vector<128xf32>
    %209 = vector.multi_reduction <maximumf>, %207, %cst_47 [0] : vector<10x128xf32> to vector<128xf32>
    %210 = vector.shape_cast %209 : vector<128xf32> to vector<1x128xf32>
    %211 = vector.broadcast %210 : vector<1x128xf32> to vector<10x128xf32>
    %212 = arith.subf %207, %211 : vector<10x128xf32>
    %213 = math.exp %212 : vector<10x128xf32>
    %cst_48 = arith.constant dense<0.000000e+00> : vector<128xf32>
    %214 = vector.multi_reduction <add>, %213, %cst_48 [0] : vector<10x128xf32> to vector<128xf32>
    %215 = vector.shape_cast %214 : vector<128xf32> to vector<1x128xf32>
    %216 = tpu.reciprocal %215 {approx = true} : vector<1x128xf32> -> vector<1x128xf32>
    %217 = vector.broadcast %216 : vector<1x128xf32> to vector<10x128xf32>
    %218 = arith.mulf %213, %217 : vector<10x128xf32>
    %cst_49 = arith.constant dense<0xFF800000> : vector<128xf32>
    %219 = vector.multi_reduction <maximumf>, %208, %cst_49 [0] : vector<10x128xf32> to vector<128xf32>
    %220 = vector.shape_cast %219 : vector<128xf32> to vector<1x128xf32>
    %221 = vector.broadcast %220 : vector<1x128xf32> to vector<10x128xf32>
    %222 = arith.subf %208, %221 : vector<10x128xf32>
    %223 = math.exp %222 : vector<10x128xf32>
    %cst_50 = arith.constant dense<0.000000e+00> : vector<128xf32>
    %224 = vector.multi_reduction <add>, %223, %cst_50 [0] : vector<10x128xf32> to vector<128xf32>
    %225 = vector.shape_cast %224 : vector<128xf32> to vector<1x128xf32>
    %226 = math.log %225 : vector<1x128xf32>
    %227 = vector.broadcast %226 : vector<1x128xf32> to vector<10x128xf32>
    %228 = arith.subf %227, %222 : vector<10x128xf32>
    %229 = arith.mulf %218, %228 : vector<10x128xf32>
    %cst_51 = arith.constant dense<0.000000e+00> : vector<128xf32>
    %230 = vector.multi_reduction <add>, %229, %cst_51 [0] : vector<10x128xf32> to vector<128xf32>
    %231 = vector.shape_cast %230 : vector<128xf32> to vector<1x128xf32>
    %232 = arith.addf %206, %231 : vector<1x128xf32>
    %233 = vector.extract_strided_slice %23 {offsets = [40, 0], sizes = [10, 128], strides = [1, 1]} : vector<100x128xf32> to vector<10x128xf32>
    %234 = vector.extract_strided_slice %22 {offsets = [40, 0], sizes = [10, 128], strides = [1, 1]} : vector<100x128xf32> to vector<10x128xf32>
    %cst_52 = arith.constant dense<0xFF800000> : vector<128xf32>
    %235 = vector.multi_reduction <maximumf>, %233, %cst_52 [0] : vector<10x128xf32> to vector<128xf32>
    %236 = vector.shape_cast %235 : vector<128xf32> to vector<1x128xf32>
    %237 = vector.broadcast %236 : vector<1x128xf32> to vector<10x128xf32>
    %238 = arith.subf %233, %237 : vector<10x128xf32>
    %239 = math.exp %238 : vector<10x128xf32>
    %cst_53 = arith.constant dense<0.000000e+00> : vector<128xf32>
    %240 = vector.multi_reduction <add>, %239, %cst_53 [0] : vector<10x128xf32> to vector<128xf32>
    %241 = vector.shape_cast %240 : vector<128xf32> to vector<1x128xf32>
    %242 = tpu.reciprocal %241 {approx = true} : vector<1x128xf32> -> vector<1x128xf32>
    %243 = vector.broadcast %242 : vector<1x128xf32> to vector<10x128xf32>
    %244 = arith.mulf %239, %243 : vector<10x128xf32>
    %cst_54 = arith.constant dense<0xFF800000> : vector<128xf32>
    %245 = vector.multi_reduction <maximumf>, %234, %cst_54 [0] : vector<10x128xf32> to vector<128xf32>
    %246 = vector.shape_cast %245 : vector<128xf32> to vector<1x128xf32>
    %247 = vector.broadcast %246 : vector<1x128xf32> to vector<10x128xf32>
    %248 = arith.subf %234, %247 : vector<10x128xf32>
    %249 = math.exp %248 : vector<10x128xf32>
    %cst_55 = arith.constant dense<0.000000e+00> : vector<128xf32>
    %250 = vector.multi_reduction <add>, %249, %cst_55 [0] : vector<10x128xf32> to vector<128xf32>
    %251 = vector.shape_cast %250 : vector<128xf32> to vector<1x128xf32>
    %252 = math.log %251 : vector<1x128xf32>
    %253 = vector.broadcast %252 : vector<1x128xf32> to vector<10x128xf32>
    %254 = arith.subf %253, %248 : vector<10x128xf32>
    %255 = arith.mulf %244, %254 : vector<10x128xf32>
    %cst_56 = arith.constant dense<0.000000e+00> : vector<128xf32>
    %256 = vector.multi_reduction <add>, %255, %cst_56 [0] : vector<10x128xf32> to vector<128xf32>
    %257 = vector.shape_cast %256 : vector<128xf32> to vector<1x128xf32>
    %258 = arith.addf %232, %257 : vector<1x128xf32>
    %259 = vector.extract_strided_slice %23 {offsets = [45, 0], sizes = [10, 128], strides = [1, 1]} : vector<100x128xf32> to vector<10x128xf32>
    %260 = vector.extract_strided_slice %22 {offsets = [45, 0], sizes = [10, 128], strides = [1, 1]} : vector<100x128xf32> to vector<10x128xf32>
    %cst_57 = arith.constant dense<0xFF800000> : vector<128xf32>
    %261 = vector.multi_reduction <maximumf>, %259, %cst_57 [0] : vector<10x128xf32> to vector<128xf32>
    %262 = vector.shape_cast %261 : vector<128xf32> to vector<1x128xf32>
    %263 = vector.broadcast %262 : vector<1x128xf32> to vector<10x128xf32>
    %264 = arith.subf %259, %263 : vector<10x128xf32>
    %265 = math.exp %264 : vector<10x128xf32>
    %cst_58 = arith.constant dense<0.000000e+00> : vector<128xf32>
    %266 = vector.multi_reduction <add>, %265, %cst_58 [0] : vector<10x128xf32> to vector<128xf32>
    %267 = vector.shape_cast %266 : vector<128xf32> to vector<1x128xf32>
    %268 = tpu.reciprocal %267 {approx = true} : vector<1x128xf32> -> vector<1x128xf32>
    %269 = vector.broadcast %268 : vector<1x128xf32> to vector<10x128xf32>
    %270 = arith.mulf %265, %269 : vector<10x128xf32>
    %cst_59 = arith.constant dense<0xFF800000> : vector<128xf32>
    %271 = vector.multi_reduction <maximumf>, %260, %cst_59 [0] : vector<10x128xf32> to vector<128xf32>
    %272 = vector.shape_cast %271 : vector<128xf32> to vector<1x128xf32>
    %273 = vector.broadcast %272 : vector<1x128xf32> to vector<10x128xf32>
    %274 = arith.subf %260, %273 : vector<10x128xf32>
    %275 = math.exp %274 : vector<10x128xf32>
    %cst_60 = arith.constant dense<0.000000e+00> : vector<128xf32>
    %276 = vector.multi_reduction <add>, %275, %cst_60 [0] : vector<10x128xf32> to vector<128xf32>
    %277 = vector.shape_cast %276 : vector<128xf32> to vector<1x128xf32>
    %278 = math.log %277 : vector<1x128xf32>
    %279 = vector.broadcast %278 : vector<1x128xf32> to vector<10x128xf32>
    %280 = arith.subf %279, %274 : vector<10x128xf32>
    %281 = arith.mulf %270, %280 : vector<10x128xf32>
    %cst_61 = arith.constant dense<0.000000e+00> : vector<128xf32>
    %282 = vector.multi_reduction <add>, %281, %cst_61 [0] : vector<10x128xf32> to vector<128xf32>
    %283 = vector.shape_cast %282 : vector<128xf32> to vector<1x128xf32>
    %284 = arith.addf %258, %283 : vector<1x128xf32>
    %285 = vector.extract_strided_slice %23 {offsets = [50, 0], sizes = [10, 128], strides = [1, 1]} : vector<100x128xf32> to vector<10x128xf32>
    %286 = vector.extract_strided_slice %22 {offsets = [50, 0], sizes = [10, 128], strides = [1, 1]} : vector<100x128xf32> to vector<10x128xf32>
    %cst_62 = arith.constant dense<0xFF800000> : vector<128xf32>
    %287 = vector.multi_reduction <maximumf>, %285, %cst_62 [0] : vector<10x128xf32> to vector<128xf32>
    %288 = vector.shape_cast %287 : vector<128xf32> to vector<1x128xf32>
    %289 = vector.broadcast %288 : vector<1x128xf32> to vector<10x128xf32>
    %290 = arith.subf %285, %289 : vector<10x128xf32>
    %291 = math.exp %290 : vector<10x128xf32>
    %cst_63 = arith.constant dense<0.000000e+00> : vector<128xf32>
    %292 = vector.multi_reduction <add>, %291, %cst_63 [0] : vector<10x128xf32> to vector<128xf32>
    %293 = vector.shape_cast %292 : vector<128xf32> to vector<1x128xf32>
    %294 = tpu.reciprocal %293 {approx = true} : vector<1x128xf32> -> vector<1x128xf32>
    %295 = vector.broadcast %294 : vector<1x128xf32> to vector<10x128xf32>
    %296 = arith.mulf %291, %295 : vector<10x128xf32>
    %cst_64 = arith.constant dense<0xFF800000> : vector<128xf32>
    %297 = vector.multi_reduction <maximumf>, %286, %cst_64 [0] : vector<10x128xf32> to vector<128xf32>
    %298 = vector.shape_cast %297 : vector<128xf32> to vector<1x128xf32>
    %299 = vector.broadcast %298 : vector<1x128xf32> to vector<10x128xf32>
    %300 = arith.subf %286, %299 : vector<10x128xf32>
    %301 = math.exp %300 : vector<10x128xf32>
    %cst_65 = arith.constant dense<0.000000e+00> : vector<128xf32>
    %302 = vector.multi_reduction <add>, %301, %cst_65 [0] : vector<10x128xf32> to vector<128xf32>
    %303 = vector.shape_cast %302 : vector<128xf32> to vector<1x128xf32>
    %304 = math.log %303 : vector<1x128xf32>
    %305 = vector.broadcast %304 : vector<1x128xf32> to vector<10x128xf32>
    %306 = arith.subf %305, %300 : vector<10x128xf32>
    %307 = arith.mulf %296, %306 : vector<10x128xf32>
    %cst_66 = arith.constant dense<0.000000e+00> : vector<128xf32>
    %308 = vector.multi_reduction <add>, %307, %cst_66 [0] : vector<10x128xf32> to vector<128xf32>
    %309 = vector.shape_cast %308 : vector<128xf32> to vector<1x128xf32>
    %310 = arith.addf %284, %309 : vector<1x128xf32>
    %311 = vector.extract_strided_slice %23 {offsets = [55, 0], sizes = [10, 128], strides = [1, 1]} : vector<100x128xf32> to vector<10x128xf32>
    %312 = vector.extract_strided_slice %22 {offsets = [55, 0], sizes = [10, 128], strides = [1, 1]} : vector<100x128xf32> to vector<10x128xf32>
    %cst_67 = arith.constant dense<0xFF800000> : vector<128xf32>
    %313 = vector.multi_reduction <maximumf>, %311, %cst_67 [0] : vector<10x128xf32> to vector<128xf32>
    %314 = vector.shape_cast %313 : vector<128xf32> to vector<1x128xf32>
    %315 = vector.broadcast %314 : vector<1x128xf32> to vector<10x128xf32>
    %316 = arith.subf %311, %315 : vector<10x128xf32>
    %317 = math.exp %316 : vector<10x128xf32>
    %cst_68 = arith.constant dense<0.000000e+00> : vector<128xf32>
    %318 = vector.multi_reduction <add>, %317, %cst_68 [0] : vector<10x128xf32> to vector<128xf32>
    %319 = vector.shape_cast %318 : vector<128xf32> to vector<1x128xf32>
    %320 = tpu.reciprocal %319 {approx = true} : vector<1x128xf32> -> vector<1x128xf32>
    %321 = vector.broadcast %320 : vector<1x128xf32> to vector<10x128xf32>
    %322 = arith.mulf %317, %321 : vector<10x128xf32>
    %cst_69 = arith.constant dense<0xFF800000> : vector<128xf32>
    %323 = vector.multi_reduction <maximumf>, %312, %cst_69 [0] : vector<10x128xf32> to vector<128xf32>
    %324 = vector.shape_cast %323 : vector<128xf32> to vector<1x128xf32>
    %325 = vector.broadcast %324 : vector<1x128xf32> to vector<10x128xf32>
    %326 = arith.subf %312, %325 : vector<10x128xf32>
    %327 = math.exp %326 : vector<10x128xf32>
    %cst_70 = arith.constant dense<0.000000e+00> : vector<128xf32>
    %328 = vector.multi_reduction <add>, %327, %cst_70 [0] : vector<10x128xf32> to vector<128xf32>
    %329 = vector.shape_cast %328 : vector<128xf32> to vector<1x128xf32>
    %330 = math.log %329 : vector<1x128xf32>
    %331 = vector.broadcast %330 : vector<1x128xf32> to vector<10x128xf32>
    %332 = arith.subf %331, %326 : vector<10x128xf32>
    %333 = arith.mulf %322, %332 : vector<10x128xf32>
    %cst_71 = arith.constant dense<0.000000e+00> : vector<128xf32>
    %334 = vector.multi_reduction <add>, %333, %cst_71 [0] : vector<10x128xf32> to vector<128xf32>
    %335 = vector.shape_cast %334 : vector<128xf32> to vector<1x128xf32>
    %336 = arith.addf %310, %335 : vector<1x128xf32>
    %337 = vector.extract_strided_slice %23 {offsets = [60, 0], sizes = [10, 128], strides = [1, 1]} : vector<100x128xf32> to vector<10x128xf32>
    %338 = vector.extract_strided_slice %22 {offsets = [60, 0], sizes = [10, 128], strides = [1, 1]} : vector<100x128xf32> to vector<10x128xf32>
    %cst_72 = arith.constant dense<0xFF800000> : vector<128xf32>
    %339 = vector.multi_reduction <maximumf>, %337, %cst_72 [0] : vector<10x128xf32> to vector<128xf32>
    %340 = vector.shape_cast %339 : vector<128xf32> to vector<1x128xf32>
    %341 = vector.broadcast %340 : vector<1x128xf32> to vector<10x128xf32>
    %342 = arith.subf %337, %341 : vector<10x128xf32>
    %343 = math.exp %342 : vector<10x128xf32>
    %cst_73 = arith.constant dense<0.000000e+00> : vector<128xf32>
    %344 = vector.multi_reduction <add>, %343, %cst_73 [0] : vector<10x128xf32> to vector<128xf32>
    %345 = vector.shape_cast %344 : vector<128xf32> to vector<1x128xf32>
    %346 = tpu.reciprocal %345 {approx = true} : vector<1x128xf32> -> vector<1x128xf32>
    %347 = vector.broadcast %346 : vector<1x128xf32> to vector<10x128xf32>
    %348 = arith.mulf %343, %347 : vector<10x128xf32>
    %cst_74 = arith.constant dense<0xFF800000> : vector<128xf32>
    %349 = vector.multi_reduction <maximumf>, %338, %cst_74 [0] : vector<10x128xf32> to vector<128xf32>
    %350 = vector.shape_cast %349 : vector<128xf32> to vector<1x128xf32>
    %351 = vector.broadcast %350 : vector<1x128xf32> to vector<10x128xf32>
    %352 = arith.subf %338, %351 : vector<10x128xf32>
    %353 = math.exp %352 : vector<10x128xf32>
    %cst_75 = arith.constant dense<0.000000e+00> : vector<128xf32>
    %354 = vector.multi_reduction <add>, %353, %cst_75 [0] : vector<10x128xf32> to vector<128xf32>
    %355 = vector.shape_cast %354 : vector<128xf32> to vector<1x128xf32>
    %356 = math.log %355 : vector<1x128xf32>
    %357 = vector.broadcast %356 : vector<1x128xf32> to vector<10x128xf32>
    %358 = arith.subf %357, %352 : vector<10x128xf32>
    %359 = arith.mulf %348, %358 : vector<10x128xf32>
    %cst_76 = arith.constant dense<0.000000e+00> : vector<128xf32>
    %360 = vector.multi_reduction <add>, %359, %cst_76 [0] : vector<10x128xf32> to vector<128xf32>
    %361 = vector.shape_cast %360 : vector<128xf32> to vector<1x128xf32>
    %362 = arith.addf %336, %361 : vector<1x128xf32>
    %363 = vector.extract_strided_slice %23 {offsets = [65, 0], sizes = [10, 128], strides = [1, 1]} : vector<100x128xf32> to vector<10x128xf32>
    %364 = vector.extract_strided_slice %22 {offsets = [65, 0], sizes = [10, 128], strides = [1, 1]} : vector<100x128xf32> to vector<10x128xf32>
    %cst_77 = arith.constant dense<0xFF800000> : vector<128xf32>
    %365 = vector.multi_reduction <maximumf>, %363, %cst_77 [0] : vector<10x128xf32> to vector<128xf32>
    %366 = vector.shape_cast %365 : vector<128xf32> to vector<1x128xf32>
    %367 = vector.broadcast %366 : vector<1x128xf32> to vector<10x128xf32>
    %368 = arith.subf %363, %367 : vector<10x128xf32>
    %369 = math.exp %368 : vector<10x128xf32>
    %cst_78 = arith.constant dense<0.000000e+00> : vector<128xf32>
    %370 = vector.multi_reduction <add>, %369, %cst_78 [0] : vector<10x128xf32> to vector<128xf32>
    %371 = vector.shape_cast %370 : vector<128xf32> to vector<1x128xf32>
    %372 = tpu.reciprocal %371 {approx = true} : vector<1x128xf32> -> vector<1x128xf32>
    %373 = vector.broadcast %372 : vector<1x128xf32> to vector<10x128xf32>
    %374 = arith.mulf %369, %373 : vector<10x128xf32>
    %cst_79 = arith.constant dense<0xFF800000> : vector<128xf32>
    %375 = vector.multi_reduction <maximumf>, %364, %cst_79 [0] : vector<10x128xf32> to vector<128xf32>
    %376 = vector.shape_cast %375 : vector<128xf32> to vector<1x128xf32>
    %377 = vector.broadcast %376 : vector<1x128xf32> to vector<10x128xf32>
    %378 = arith.subf %364, %377 : vector<10x128xf32>
    %379 = math.exp %378 : vector<10x128xf32>
    %cst_80 = arith.constant dense<0.000000e+00> : vector<128xf32>
    %380 = vector.multi_reduction <add>, %379, %cst_80 [0] : vector<10x128xf32> to vector<128xf32>
    %381 = vector.shape_cast %380 : vector<128xf32> to vector<1x128xf32>
    %382 = math.log %381 : vector<1x128xf32>
    %383 = vector.broadcast %382 : vector<1x128xf32> to vector<10x128xf32>
    %384 = arith.subf %383, %378 : vector<10x128xf32>
    %385 = arith.mulf %374, %384 : vector<10x128xf32>
    %cst_81 = arith.constant dense<0.000000e+00> : vector<128xf32>
    %386 = vector.multi_reduction <add>, %385, %cst_81 [0] : vector<10x128xf32> to vector<128xf32>
    %387 = vector.shape_cast %386 : vector<128xf32> to vector<1x128xf32>
    %388 = arith.addf %362, %387 : vector<1x128xf32>
    %389 = vector.extract_strided_slice %23 {offsets = [70, 0], sizes = [10, 128], strides = [1, 1]} : vector<100x128xf32> to vector<10x128xf32>
    %390 = vector.extract_strided_slice %22 {offsets = [70, 0], sizes = [10, 128], strides = [1, 1]} : vector<100x128xf32> to vector<10x128xf32>
    %cst_82 = arith.constant dense<0xFF800000> : vector<128xf32>
    %391 = vector.multi_reduction <maximumf>, %389, %cst_82 [0] : vector<10x128xf32> to vector<128xf32>
    %392 = vector.shape_cast %391 : vector<128xf32> to vector<1x128xf32>
    %393 = vector.broadcast %392 : vector<1x128xf32> to vector<10x128xf32>
    %394 = arith.subf %389, %393 : vector<10x128xf32>
    %395 = math.exp %394 : vector<10x128xf32>
    %cst_83 = arith.constant dense<0.000000e+00> : vector<128xf32>
    %396 = vector.multi_reduction <add>, %395, %cst_83 [0] : vector<10x128xf32> to vector<128xf32>
    %397 = vector.shape_cast %396 : vector<128xf32> to vector<1x128xf32>
    %398 = tpu.reciprocal %397 {approx = true} : vector<1x128xf32> -> vector<1x128xf32>
    %399 = vector.broadcast %398 : vector<1x128xf32> to vector<10x128xf32>
    %400 = arith.mulf %395, %399 : vector<10x128xf32>
    %cst_84 = arith.constant dense<0xFF800000> : vector<128xf32>
    %401 = vector.multi_reduction <maximumf>, %390, %cst_84 [0] : vector<10x128xf32> to vector<128xf32>
    %402 = vector.shape_cast %401 : vector<128xf32> to vector<1x128xf32>
    %403 = vector.broadcast %402 : vector<1x128xf32> to vector<10x128xf32>
    %404 = arith.subf %390, %403 : vector<10x128xf32>
    %405 = math.exp %404 : vector<10x128xf32>
    %cst_85 = arith.constant dense<0.000000e+00> : vector<128xf32>
    %406 = vector.multi_reduction <add>, %405, %cst_85 [0] : vector<10x128xf32> to vector<128xf32>
    %407 = vector.shape_cast %406 : vector<128xf32> to vector<1x128xf32>
    %408 = math.log %407 : vector<1x128xf32>
    %409 = vector.broadcast %408 : vector<1x128xf32> to vector<10x128xf32>
    %410 = arith.subf %409, %404 : vector<10x128xf32>
    %411 = arith.mulf %400, %410 : vector<10x128xf32>
    %cst_86 = arith.constant dense<0.000000e+00> : vector<128xf32>
    %412 = vector.multi_reduction <add>, %411, %cst_86 [0] : vector<10x128xf32> to vector<128xf32>
    %413 = vector.shape_cast %412 : vector<128xf32> to vector<1x128xf32>
    %414 = arith.addf %388, %413 : vector<1x128xf32>
    %415 = vector.extract_strided_slice %23 {offsets = [75, 0], sizes = [10, 128], strides = [1, 1]} : vector<100x128xf32> to vector<10x128xf32>
    %416 = vector.extract_strided_slice %22 {offsets = [75, 0], sizes = [10, 128], strides = [1, 1]} : vector<100x128xf32> to vector<10x128xf32>
    %cst_87 = arith.constant dense<0xFF800000> : vector<128xf32>
    %417 = vector.multi_reduction <maximumf>, %415, %cst_87 [0] : vector<10x128xf32> to vector<128xf32>
    %418 = vector.shape_cast %417 : vector<128xf32> to vector<1x128xf32>
    %419 = vector.broadcast %418 : vector<1x128xf32> to vector<10x128xf32>
    %420 = arith.subf %415, %419 : vector<10x128xf32>
    %421 = math.exp %420 : vector<10x128xf32>
    %cst_88 = arith.constant dense<0.000000e+00> : vector<128xf32>
    %422 = vector.multi_reduction <add>, %421, %cst_88 [0] : vector<10x128xf32> to vector<128xf32>
    %423 = vector.shape_cast %422 : vector<128xf32> to vector<1x128xf32>
    %424 = tpu.reciprocal %423 {approx = true} : vector<1x128xf32> -> vector<1x128xf32>
    %425 = vector.broadcast %424 : vector<1x128xf32> to vector<10x128xf32>
    %426 = arith.mulf %421, %425 : vector<10x128xf32>
    %cst_89 = arith.constant dense<0xFF800000> : vector<128xf32>
    %427 = vector.multi_reduction <maximumf>, %416, %cst_89 [0] : vector<10x128xf32> to vector<128xf32>
    %428 = vector.shape_cast %427 : vector<128xf32> to vector<1x128xf32>
    %429 = vector.broadcast %428 : vector<1x128xf32> to vector<10x128xf32>
    %430 = arith.subf %416, %429 : vector<10x128xf32>
    %431 = math.exp %430 : vector<10x128xf32>
    %cst_90 = arith.constant dense<0.000000e+00> : vector<128xf32>
    %432 = vector.multi_reduction <add>, %431, %cst_90 [0] : vector<10x128xf32> to vector<128xf32>
    %433 = vector.shape_cast %432 : vector<128xf32> to vector<1x128xf32>
    %434 = math.log %433 : vector<1x128xf32>
    %435 = vector.broadcast %434 : vector<1x128xf32> to vector<10x128xf32>
    %436 = arith.subf %435, %430 : vector<10x128xf32>
    %437 = arith.mulf %426, %436 : vector<10x128xf32>
    %cst_91 = arith.constant dense<0.000000e+00> : vector<128xf32>
    %438 = vector.multi_reduction <add>, %437, %cst_91 [0] : vector<10x128xf32> to vector<128xf32>
    %439 = vector.shape_cast %438 : vector<128xf32> to vector<1x128xf32>
    %440 = arith.addf %414, %439 : vector<1x128xf32>
    %441 = vector.extract_strided_slice %23 {offsets = [80, 0], sizes = [10, 128], strides = [1, 1]} : vector<100x128xf32> to vector<10x128xf32>
    %442 = vector.extract_strided_slice %22 {offsets = [80, 0], sizes = [10, 128], strides = [1, 1]} : vector<100x128xf32> to vector<10x128xf32>
    %cst_92 = arith.constant dense<0xFF800000> : vector<128xf32>
    %443 = vector.multi_reduction <maximumf>, %441, %cst_92 [0] : vector<10x128xf32> to vector<128xf32>
    %444 = vector.shape_cast %443 : vector<128xf32> to vector<1x128xf32>
    %445 = vector.broadcast %444 : vector<1x128xf32> to vector<10x128xf32>
    %446 = arith.subf %441, %445 : vector<10x128xf32>
    %447 = math.exp %446 : vector<10x128xf32>
    %cst_93 = arith.constant dense<0.000000e+00> : vector<128xf32>
    %448 = vector.multi_reduction <add>, %447, %cst_93 [0] : vector<10x128xf32> to vector<128xf32>
    %449 = vector.shape_cast %448 : vector<128xf32> to vector<1x128xf32>
    %450 = tpu.reciprocal %449 {approx = true} : vector<1x128xf32> -> vector<1x128xf32>
    %451 = vector.broadcast %450 : vector<1x128xf32> to vector<10x128xf32>
    %452 = arith.mulf %447, %451 : vector<10x128xf32>
    %cst_94 = arith.constant dense<0xFF800000> : vector<128xf32>
    %453 = vector.multi_reduction <maximumf>, %442, %cst_94 [0] : vector<10x128xf32> to vector<128xf32>
    %454 = vector.shape_cast %453 : vector<128xf32> to vector<1x128xf32>
    %455 = vector.broadcast %454 : vector<1x128xf32> to vector<10x128xf32>
    %456 = arith.subf %442, %455 : vector<10x128xf32>
    %457 = math.exp %456 : vector<10x128xf32>
    %cst_95 = arith.constant dense<0.000000e+00> : vector<128xf32>
    %458 = vector.multi_reduction <add>, %457, %cst_95 [0] : vector<10x128xf32> to vector<128xf32>
    %459 = vector.shape_cast %458 : vector<128xf32> to vector<1x128xf32>
    %460 = math.log %459 : vector<1x128xf32>
    %461 = vector.broadcast %460 : vector<1x128xf32> to vector<10x128xf32>
    %462 = arith.subf %461, %456 : vector<10x128xf32>
    %463 = arith.mulf %452, %462 : vector<10x128xf32>
    %cst_96 = arith.constant dense<0.000000e+00> : vector<128xf32>
    %464 = vector.multi_reduction <add>, %463, %cst_96 [0] : vector<10x128xf32> to vector<128xf32>
    %465 = vector.shape_cast %464 : vector<128xf32> to vector<1x128xf32>
    %466 = arith.addf %440, %465 : vector<1x128xf32>
    %467 = vector.extract_strided_slice %23 {offsets = [85, 0], sizes = [10, 128], strides = [1, 1]} : vector<100x128xf32> to vector<10x128xf32>
    %468 = vector.extract_strided_slice %22 {offsets = [85, 0], sizes = [10, 128], strides = [1, 1]} : vector<100x128xf32> to vector<10x128xf32>
    %cst_97 = arith.constant dense<0xFF800000> : vector<128xf32>
    %469 = vector.multi_reduction <maximumf>, %467, %cst_97 [0] : vector<10x128xf32> to vector<128xf32>
    %470 = vector.shape_cast %469 : vector<128xf32> to vector<1x128xf32>
    %471 = vector.broadcast %470 : vector<1x128xf32> to vector<10x128xf32>
    %472 = arith.subf %467, %471 : vector<10x128xf32>
    %473 = math.exp %472 : vector<10x128xf32>
    %cst_98 = arith.constant dense<0.000000e+00> : vector<128xf32>
    %474 = vector.multi_reduction <add>, %473, %cst_98 [0] : vector<10x128xf32> to vector<128xf32>
    %475 = vector.shape_cast %474 : vector<128xf32> to vector<1x128xf32>
    %476 = tpu.reciprocal %475 {approx = true} : vector<1x128xf32> -> vector<1x128xf32>
    %477 = vector.broadcast %476 : vector<1x128xf32> to vector<10x128xf32>
    %478 = arith.mulf %473, %477 : vector<10x128xf32>
    %cst_99 = arith.constant dense<0xFF800000> : vector<128xf32>
    %479 = vector.multi_reduction <maximumf>, %468, %cst_99 [0] : vector<10x128xf32> to vector<128xf32>
    %480 = vector.shape_cast %479 : vector<128xf32> to vector<1x128xf32>
    %481 = vector.broadcast %480 : vector<1x128xf32> to vector<10x128xf32>
    %482 = arith.subf %468, %481 : vector<10x128xf32>
    %483 = math.exp %482 : vector<10x128xf32>
    %cst_100 = arith.constant dense<0.000000e+00> : vector<128xf32>
    %484 = vector.multi_reduction <add>, %483, %cst_100 [0] : vector<10x128xf32> to vector<128xf32>
    %485 = vector.shape_cast %484 : vector<128xf32> to vector<1x128xf32>
    %486 = math.log %485 : vector<1x128xf32>
    %487 = vector.broadcast %486 : vector<1x128xf32> to vector<10x128xf32>
    %488 = arith.subf %487, %482 : vector<10x128xf32>
    %489 = arith.mulf %478, %488 : vector<10x128xf32>
    %cst_101 = arith.constant dense<0.000000e+00> : vector<128xf32>
    %490 = vector.multi_reduction <add>, %489, %cst_101 [0] : vector<10x128xf32> to vector<128xf32>
    %491 = vector.shape_cast %490 : vector<128xf32> to vector<1x128xf32>
    %492 = arith.addf %466, %491 : vector<1x128xf32>
    %493 = vector.extract_strided_slice %23 {offsets = [90, 0], sizes = [10, 128], strides = [1, 1]} : vector<100x128xf32> to vector<10x128xf32>
    %494 = vector.extract_strided_slice %22 {offsets = [90, 0], sizes = [10, 128], strides = [1, 1]} : vector<100x128xf32> to vector<10x128xf32>
    %cst_102 = arith.constant dense<0xFF800000> : vector<128xf32>
    %495 = vector.multi_reduction <maximumf>, %493, %cst_102 [0] : vector<10x128xf32> to vector<128xf32>
    %496 = vector.shape_cast %495 : vector<128xf32> to vector<1x128xf32>
    %497 = vector.broadcast %496 : vector<1x128xf32> to vector<10x128xf32>
    %498 = arith.subf %493, %497 : vector<10x128xf32>
    %499 = math.exp %498 : vector<10x128xf32>
    %cst_103 = arith.constant dense<0.000000e+00> : vector<128xf32>
    %500 = vector.multi_reduction <add>, %499, %cst_103 [0] : vector<10x128xf32> to vector<128xf32>
    %501 = vector.shape_cast %500 : vector<128xf32> to vector<1x128xf32>
    %502 = tpu.reciprocal %501 {approx = true} : vector<1x128xf32> -> vector<1x128xf32>
    %503 = vector.broadcast %502 : vector<1x128xf32> to vector<10x128xf32>
    %504 = arith.mulf %499, %503 : vector<10x128xf32>
    %cst_104 = arith.constant dense<0xFF800000> : vector<128xf32>
    %505 = vector.multi_reduction <maximumf>, %494, %cst_104 [0] : vector<10x128xf32> to vector<128xf32>
    %506 = vector.shape_cast %505 : vector<128xf32> to vector<1x128xf32>
    %507 = vector.broadcast %506 : vector<1x128xf32> to vector<10x128xf32>
    %508 = arith.subf %494, %507 : vector<10x128xf32>
    %509 = math.exp %508 : vector<10x128xf32>
    %cst_105 = arith.constant dense<0.000000e+00> : vector<128xf32>
    %510 = vector.multi_reduction <add>, %509, %cst_105 [0] : vector<10x128xf32> to vector<128xf32>
    %511 = vector.shape_cast %510 : vector<128xf32> to vector<1x128xf32>
    %512 = math.log %511 : vector<1x128xf32>
    %513 = vector.broadcast %512 : vector<1x128xf32> to vector<10x128xf32>
    %514 = arith.subf %513, %508 : vector<10x128xf32>
    %515 = arith.mulf %504, %514 : vector<10x128xf32>
    %cst_106 = arith.constant dense<0.000000e+00> : vector<128xf32>
    %516 = vector.multi_reduction <add>, %515, %cst_106 [0] : vector<10x128xf32> to vector<128xf32>
    %517 = vector.shape_cast %516 : vector<128xf32> to vector<1x128xf32>
    %518 = arith.addf %492, %517 : vector<1x128xf32>
    %519 = tpu.iota {dimensions = array<i32: 1>} : vector<1x128xi32>
    %c128_i32 = arith.constant 128 : i32
    %520 = arith.muli %arg0, %c128_i32 : i32
    %521 = vector.broadcast %520 : i32 to vector<1x128xi32>
    %522 = arith.addi %519, %521 : vector<1x128xi32>
    %c8_i32 = arith.constant 8 : i32
    %523 = vector.broadcast %c8_i32 : i32 to vector<1x128xi32>
    %524 = arith.cmpi slt, %522, %523 : vector<1x128xi32>
    %cst_107 = arith.constant 0.000000e+00 : f32
    %525 = vector.broadcast %cst_107 : f32 to vector<1x128xf32>
    %526 = arith.select %524, %518, %525 : vector<1x128xi1>, vector<1x128xf32>
    %527 = vector.shape_cast %526 : vector<1x128xf32> to vector<1x1x128xf32>
    %cst_108 = arith.constant dense<0.000000e+00> : vector<1xf32>
    %528 = vector.multi_reduction <add>, %527, %cst_108 [1, 2] : vector<1x1x128xf32> to vector<1xf32>
    %529 = vector.shape_cast %528 : vector<1xf32> to vector<1x1x1xf32>
    %530 = vector.extract %529[0, 0, 0] : f32 from vector<1x1x1xf32>
    %531 = vector.broadcast %530 : f32 to vector<1x1xf32>
    %cst_109 = arith.constant 5.000000e-01 : f32
    %532 = vector.broadcast %cst_109 : f32 to vector<1x1xf32>
    %533 = arith.mulf %532, %531 : vector<1x1xf32>
    %534 = arith.addf %21, %533 : vector<1x1xf32>
    %cst_110 = arith.constant 1.250000e-01 : f32
    %535 = vector.broadcast %cst_110 : f32 to vector<1x1xf32>
    %536 = arith.mulf %534, %535 : vector<1x1xf32>
    %537 = vector.shape_cast %536 : vector<1x1xf32> to vector<1x1xf32>
    %538 = vector.broadcast %537 : vector<1x1xf32> to vector<8x128xf32>
    %c0_111 = arith.constant 0 : index
    %c0_112 = arith.constant 0 : index
    %539 = vector.load %arg5[%c0_111, %c0_112] : memref<8x128xf32, #tpu.memory_space<vmem>>, vector<8x128xf32>
    tpu.vector_store %arg5[%c0_111, %c0_112], %538 {strides = array<i32>} : memref<8x128xf32, #tpu.memory_space<vmem>>, vector<8x128xf32>,
    return
  }
  func.func @transform_0(%arg0: i32) -> (i32, i32) {
    %c0_i32 = arith.constant 0 : i32
    %c0_i32_0 = arith.constant 0 : i32
    return %arg0, %c0_i32 : i32, i32
  }
  func.func @transform_1(%arg0: i32) -> (i32, i32) {
    %c0_i32 = arith.constant 0 : i32
    %c0_i32_0 = arith.constant 0 : i32
    return %arg0, %c0_i32 : i32, i32
  }
  func.func @transform_2(%arg0: i32) -> (i32, i32) {
    %c0_i32 = arith.constant 0 : i32
    %c0_i32_0 = arith.constant 0 : i32
    return %c0_i32, %arg0 : i32, i32
  }
  func.func @transform_3(%arg0: i32) -> (i32, i32) {
    %c0_i32 = arith.constant 0 : i32
    %c0_i32_0 = arith.constant 0 : i32
    return %c0_i32, %arg0 : i32, i32
  }
  func.func @transform_4(%arg0: i32) -> (i32, i32) {
    %c0_i32 = arith.constant 0 : i32
    %c0_i32_0 = arith.constant 0 : i32
    return %arg0, %c0_i32 : i32, i32
  }
}

</mosaic_0001>

<llo_original>
// kernel: pskd_v13_loss.1
$region0: #{pskd_v13_loss.1}
  #allocation0 [shape = 'u32[]', space=smem, size = 0x4, offset = 0x4, fixed_abs, tag = 'smem constant byte address 0x4 - core index']
  #allocation1 [shape = 'u32[144,128]{1,0:T(1,128)}', space=vmem, size = 0x12000, scoped, tag = 'internal scratch']
  %s0 = inlined_call_operand.vmem [shape: f32[128,128], index: 0, kind: input, shape index: {}]
  %s1 = inlined_call_operand.vmem [shape: f32[128,128], index: 1, kind: input, shape index: {}]
  %s2 = inlined_call_operand.vmem [shape: f32[100,128], index: 2, kind: input, shape index: {}]
  %s3 = inlined_call_operand.vmem [shape: f32[100,128], index: 3, kind: input, shape index: {}]
  %s4 = inlined_call_operand.vmem [shape: f32[8,128], index: 4, kind: output, shape index: {}]
  %s5 = sld [smem:[#allocation0]]
  $region26: #{pskd_v13_loss.1} parent=0
    _
  %s7 = ssub.s32 1, %s5
  %s8 = scalar_select 0, %s7, %s5
  // Predicated region
  $region2: #{pskd_v13_loss.1} parent=0 // pred_check
    _
  $region3: #{pskd_v13_loss.1} parent=0 // pred_check_branch
    %10 = sbr.rel (0) target = $region5
  $region4: #{pskd_v13_loss.1} parent=0 // pred_region
    _
  $region5: #{pskd_v13_loss.1} parent=0 // pred_fallthru
    _
  // Predicated region
  $region6: #{pskd_v13_loss.1} parent=0 // pred_check
    _
  $region7: #{pskd_v13_loss.1} parent=0 // pred_check_branch
    %12 = sbr.rel (0) target = $region9
  $region8: #{pskd_v13_loss.1} parent=0 // pred_region
    _
  $region9: #{pskd_v13_loss.1} parent=0 // pred_fallthru
    _
  // Predicated region
  $region10: #{pskd_v13_loss.1} parent=0 // pred_check
    _
  $region11: #{pskd_v13_loss.1} parent=0 // pred_check_branch
    %14 = sbr.rel (0) target = $region13
  $region12: #{pskd_v13_loss.1} parent=0 // pred_region
    _
  $region13: #{pskd_v13_loss.1} parent=0 // pred_fallthru
    _
  // Predicated region
  $region14: #{pskd_v13_loss.1} parent=0 // pred_check
    _
  $region15: #{pskd_v13_loss.1} parent=0 // pred_check_branch
    %16 = sbr.rel (0) target = $region17
  $region16: #{pskd_v13_loss.1} parent=0 // pred_region
    _
  $region17: #{pskd_v13_loss.1} parent=0 // pred_fallthru
    _
  %v17 = vld [vmem:[%s0] sm:$0xff]
  %v18 = vld [vmem:[%s0 + $0x8] sm:$0xff]
  %v19 = vld [vmem:[%s0 + $0x10] sm:$0xff]
  %v20 = vld [vmem:[%s0 + $0x18] sm:$0xff]
  %v21 = vld [vmem:[%s0 + $0x20] sm:$0xff]
  %v22 = vld [vmem:[%s0 + $0x28] sm:$0xff]
  %v23 = vld [vmem:[%s0 + $0x30] sm:$0xff]
  %v24 = vld [vmem:[%s0 + $0x38] sm:$0xff]
  %v25 = vld [vmem:[%s0 + $0x40] sm:$0xff]
  %v26 = vld [vmem:[%s0 + $0x48] sm:$0xff]
  %v27 = vld [vmem:[%s0 + $0x50] sm:$0xff]
  %v28 = vld [vmem:[%s0 + $0x58] sm:$0xff]
  %v29 = vld [vmem:[%s0 + $0x60] sm:$0xff]
  %v30 = vld [vmem:[%s0 + $0x68] sm:$0xff]
  %v31 = vld [vmem:[%s0 + $0x70] sm:$0xff]
  %v32 = vld [vmem:[%s0 + $0x78] sm:$0xff]
  %v33 = vld [vmem:[%s1] sm:$0xff]
  %v34 = vld [vmem:[%s1 + $0x8] sm:$0xff]
  %v35 = vld [vmem:[%s1 + $0x10] sm:$0xff]
  %v36 = vld [vmem:[%s1 + $0x18] sm:$0xff]
  %v37 = vld [vmem:[%s1 + $0x20] sm:$0xff]
  %v38 = vld [vmem:[%s1 + $0x28] sm:$0xff]
  %v39 = vld [vmem:[%s1 + $0x30] sm:$0xff]
  %v40 = vld [vmem:[%s1 + $0x38] sm:$0xff]
  %v41 = vld [vmem:[%s1 + $0x40] sm:$0xff]
  %v42 = vld [vmem:[%s1 + $0x48] sm:$0xff]
  %v43 = vld [vmem:[%s1 + $0x50] sm:$0xff]
  %v44 = vld [vmem:[%s1 + $0x58] sm:$0xff]
  %v45 = vld [vmem:[%s1 + $0x60] sm:$0xff]
  %v46 = vld [vmem:[%s1 + $0x68] sm:$0xff]
  %v47 = vld [vmem:[%s1 + $0x70] sm:$0xff]
  %v48 = vld [vmem:[%s1 + $0x78] sm:$0xff]
  %49 = vmax.xlane.f32.xlu0 %v17
  %v50 = vpop.xlane.xlu0 %49
  %51 = vmax.xlane.f32.xlu0 %v18
  %v52 = vpop.xlane.xlu0 %51
  %53 = vmax.xlane.f32.xlu0 %v19
  %v54 = vpop.xlane.xlu0 %53
  %55 = vmax.xlane.f32.xlu0 %v20
  %v56 = vpop.xlane.xlu0 %55
  %57 = vmax.xlane.f32.xlu0 %v21
  %v58 = vpop.xlane.xlu0 %57
  %59 = vmax.xlane.f32.xlu0 %v22
  %v60 = vpop.xlane.xlu0 %59
  %61 = vmax.xlane.f32.xlu0 %v23
  %v62 = vpop.xlane.xlu0 %61
  %63 = vmax.xlane.f32.xlu0 %v24
  %v64 = vpop.xlane.xlu0 %63
  %65 = vmax.xlane.f32.xlu0 %v25
  %v66 = vpop.xlane.xlu0 %65
  %67 = vmax.xlane.f32.xlu0 %v26
  %v68 = vpop.xlane.xlu0 %67
  %69 = vmax.xlane.f32.xlu0 %v27
  %v70 = vpop.xlane.xlu0 %69
  %71 = vmax.xlane.f32.xlu0 %v28
  %v72 = vpop.xlane.xlu0 %71
  %73 = vmax.xlane.f32.xlu0 %v29
  %v74 = vpop.xlane.xlu0 %73
  %75 = vmax.xlane.f32.xlu0 %v30
  %v76 = vpop.xlane.xlu0 %75
  %77 = vmax.xlane.f32.xlu0 %v31
  %v78 = vpop.xlane.xlu0 %77
  %79 = vmax.xlane.f32.xlu0 %v32
  %v80 = vpop.xlane.xlu0 %79
  %v81 = vsub.f32 %v17, %v50
  %v82 = vsub.f32 %v18, %v52
  %v83 = vsub.f32 %v19, %v54
  %v84 = vsub.f32 %v20, %v56
  %v85 = vsub.f32 %v21, %v58
  %v86 = vsub.f32 %v22, %v60
  %v87 = vsub.f32 %v23, %v62
  %v88 = vsub.f32 %v24, %v64
  %v89 = vsub.f32 %v25, %v66
  %v90 = vsub.f32 %v26, %v68
  %v91 = vsub.f32 %v27, %v70
  %v92 = vsub.f32 %v28, %v72
  %v93 = vsub.f32 %v29, %v74
  %v94 = vsub.f32 %v30, %v76
  %v95 = vsub.f32 %v31, %v78
  %v96 = vsub.f32 %v32, %v80
  %v97 = vmul.f32 %v81, 1.442695
  %v98 = vpow.pop %v97
  %v99 = vmul.f32 %v82, 1.442695
  %v100 = vpow.pop %v99
  %v101 = vmul.f32 %v83, 1.442695
  %v102 = vpow.pop %v101
  %v103 = vmul.f32 %v84, 1.442695
  %v104 = vpow.pop %v103
  %v105 = vmul.f32 %v85, 1.442695
  %v106 = vpow.pop %v105
  %v107 = vmul.f32 %v86, 1.442695
  %v108 = vpow.pop %v107
  %v109 = vmul.f32 %v87, 1.442695
  %v110 = vpow.pop %v109
  %v111 = vmul.f32 %v88, 1.442695
  %v112 = vpow.pop %v111
  %v113 = vmul.f32 %v89, 1.442695
  %v114 = vpow.pop %v113
  %v115 = vmul.f32 %v90, 1.442695
  %v116 = vpow.pop %v115
  %v117 = vmul.f32 %v91, 1.442695
  %v118 = vpow.pop %v117
  %v119 = vmul.f32 %v92, 1.442695
  %v120 = vpow.pop %v119
  %v121 = vmul.f32 %v93, 1.442695
  %v122 = vpow.pop %v121
  %v123 = vmul.f32 %v94, 1.442695
  %v124 = vpow.pop %v123
  %v125 = vmul.f32 %v95, 1.442695
  %v126 = vpow.pop %v125
  %v127 = vmul.f32 %v96, 1.442695
  %v128 = vpow.pop %v127
  %129 = vadd.xlane.f32.xlu0 %v98
  %v130 = vpop.xlane.xlu0 %129
  %131 = vadd.xlane.f32.xlu0 %v100
  %v132 = vpop.xlane.xlu0 %131
  %133 = vadd.xlane.f32.xlu0 %v102
  %v134 = vpop.xlane.xlu0 %133
  %135 = vadd.xlane.f32.xlu0 %v104
  %v136 = vpop.xlane.xlu0 %135
  %137 = vadd.xlane.f32.xlu0 %v106
  %v138 = vpop.xlane.xlu0 %137
  %139 = vadd.xlane.f32.xlu0 %v108
  %v140 = vpop.xlane.xlu0 %139
  %141 = vadd.xlane.f32.xlu0 %v110
  %v142 = vpop.xlane.xlu0 %141
  %143 = vadd.xlane.f32.xlu0 %v112
  %v144 = vpop.xlane.xlu0 %143
  %145 = vadd.xlane.f32.xlu0 %v114
  %v146 = vpop.xlane.xlu0 %145
  %147 = vadd.xlane.f32.xlu0 %v116
  %v148 = vpop.xlane.xlu0 %147
  %149 = vadd.xlane.f32.xlu0 %v118
  %v150 = vpop.xlane.xlu0 %149
  %151 = vadd.xlane.f32.xlu0 %v120
  %v152 = vpop.xlane.xlu0 %151
  %153 = vadd.xlane.f32.xlu0 %v122
  %v154 = vpop.xlane.xlu0 %153
  %155 = vadd.xlane.f32.xlu0 %v124
  %v156 = vpop.xlane.xlu0 %155
  %157 = vadd.xlane.f32.xlu0 %v126
  %v158 = vpop.xlane.xlu0 %157
  %159 = vadd.xlane.f32.xlu0 %v128
  %v160 = vpop.xlane.xlu0 %159
  %v161 = vlog2.pop %v130
  %v162 = vmul.f32 %v161, 0.6931472
  %v163 = vlog2.pop %v132
  %v164 = vmul.f32 %v163, 0.6931472
  %v165 = vlog2.pop %v134
  %v166 = vmul.f32 %v165, 0.6931472
  %v167 = vlog2.pop %v136
  %v168 = vmul.f32 %v167, 0.6931472
  %v169 = vlog2.pop %v138
  %v170 = vmul.f32 %v169, 0.6931472
  %v171 = vlog2.pop %v140
  %v172 = vmul.f32 %v171, 0.6931472
  %v173 = vlog2.pop %v142
  %v174 = vmul.f32 %v173, 0.6931472
  %v175 = vlog2.pop %v144
  %v176 = vmul.f32 %v175, 0.6931472
  %v177 = vlog2.pop %v146
  %v178 = vmul.f32 %v177, 0.6931472
  %v179 = vlog2.pop %v148
  %v180 = vmul.f32 %v179, 0.6931472
  %v181 = vlog2.pop %v150
  %v182 = vmul.f32 %v181, 0.6931472
  %v183 = vlog2.pop %v152
  %v184 = vmul.f32 %v183, 0.6931472
  %v185 = vlog2.pop %v154
  %v186 = vmul.f32 %v185, 0.6931472
  %v187 = vlog2.pop %v156
  %v188 = vmul.f32 %v187, 0.6931472
  %v189 = vlog2.pop %v158
  %v190 = vmul.f32 %v189, 0.6931472
  %v191 = vlog2.pop %v160
  %v192 = vmul.f32 %v191, 0.6931472
  %193 = vadd.xlane.f32.xlu0 %v33
  %v194 = vpop.xlane.xlu0 %193
  %195 = vadd.xlane.f32.xlu0 %v34
  %v196 = vpop.xlane.xlu0 %195
  %197 = vadd.xlane.f32.xlu0 %v35
  %v198 = vpop.xlane.xlu0 %197
  %199 = vadd.xlane.f32.xlu0 %v36
  %v200 = vpop.xlane.xlu0 %199
  %201 = vadd.xlane.f32.xlu0 %v37
  %v202 = vpop.xlane.xlu0 %201
  %203 = vadd.xlane.f32.xlu0 %v38
  %v204 = vpop.xlane.xlu0 %203
  %205 = vadd.xlane.f32.xlu0 %v39
  %v206 = vpop.xlane.xlu0 %205
  %207 = vadd.xlane.f32.xlu0 %v40
  %v208 = vpop.xlane.xlu0 %207
  %209 = vadd.xlane.f32.xlu0 %v41
  %v210 = vpop.xlane.xlu0 %209
  %211 = vadd.xlane.f32.xlu0 %v42
  %v212 = vpop.xlane.xlu0 %211
  %213 = vadd.xlane.f32.xlu0 %v43
  %v214 = vpop.xlane.xlu0 %213
  %215 = vadd.xlane.f32.xlu0 %v44
  %v216 = vpop.xlane.xlu0 %215
  %217 = vadd.xlane.f32.xlu0 %v45
  %v218 = vpop.xlane.xlu0 %217
  %219 = vadd.xlane.f32.xlu0 %v46
  %v220 = vpop.xlane.xlu0 %219
  %221 = vadd.xlane.f32.xlu0 %v47
  %v222 = vpop.xlane.xlu0 %221
  %223 = vadd.xlane.f32.xlu0 %v48
  %v224 = vpop.xlane.xlu0 %223
  %v225 = vmul.f32 %v194, %v162
  %v226 = vmul.f32 %v196, %v164
  %v227 = vmul.f32 %v198, %v166
  %v228 = vmul.f32 %v200, %v168
  %v229 = vmul.f32 %v202, %v170
  %v230 = vmul.f32 %v204, %v172
  %v231 = vmul.f32 %v206, %v174
  %v232 = vmul.f32 %v208, %v176
  %v233 = vmul.f32 %v210, %v178
  %v234 = vmul.f32 %v212, %v180
  %v235 = vmul.f32 %v214, %v182
  %v236 = vmul.f32 %v216, %v184
  %v237 = vmul.f32 %v218, %v186
  %v238 = vmul.f32 %v220, %v188
  %v239 = vmul.f32 %v222, %v190
  %v240 = vmul.f32 %v224, %v192
  %v241 = vmul.f32 %v33, %v81
  %v242 = vmul.f32 %v34, %v82
  %v243 = vmul.f32 %v35, %v83
  %v244 = vmul.f32 %v36, %v84
  %v245 = vmul.f32 %v37, %v85
  %v246 = vmul.f32 %v38, %v86
  %v247 = vmul.f32 %v39, %v87
  %v248 = vmul.f32 %v40, %v88
  %v249 = vmul.f32 %v41, %v89
  %v250 = vmul.f32 %v42, %v90
  %v251 = vmul.f32 %v43, %v91
  %v252 = vmul.f32 %v44, %v92
  %v253 = vmul.f32 %v45, %v93
  %v254 = vmul.f32 %v46, %v94
  %v255 = vmul.f32 %v47, %v95
  %v256 = vmul.f32 %v48, %v96
  %257 = vadd.xlane.f32.xlu0 %v241
  %v258 = vpop.xlane.xlu0 %257
  %259 = vadd.xlane.f32.xlu0 %v242
  %v260 = vpop.xlane.xlu0 %259
  %261 = vadd.xlane.f32.xlu0 %v243
  %v262 = vpop.xlane.xlu0 %261
  %263 = vadd.xlane.f32.xlu0 %v244
  %v264 = vpop.xlane.xlu0 %263
  %265 = vadd.xlane.f32.xlu0 %v245
  %v266 = vpop.xlane.xlu0 %265
  %267 = vadd.xlane.f32.xlu0 %v246
  %v268 = vpop.xlane.xlu0 %267
  %269 = vadd.xlane.f32.xlu0 %v247
  %v270 = vpop.xlane.xlu0 %269
  %271 = vadd.xlane.f32.xlu0 %v248
  %v272 = vpop.xlane.xlu0 %271
  %273 = vadd.xlane.f32.xlu0 %v249
  %v274 = vpop.xlane.xlu0 %273
  %275 = vadd.xlane.f32.xlu0 %v250
  %v276 = vpop.xlane.xlu0 %275
  %277 = vadd.xlane.f32.xlu0 %v251
  %v278 = vpop.xlane.xlu0 %277
  %279 = vadd.xlane.f32.xlu0 %v252
  %v280 = vpop.xlane.xlu0 %279
  %281 = vadd.xlane.f32.xlu0 %v253
  %v282 = vpop.xlane.xlu0 %281
  %283 = vadd.xlane.f32.xlu0 %v254
  %v284 = vpop.xlane.xlu0 %283
  %285 = vadd.xlane.f32.xlu0 %v255
  %v286 = vpop.xlane.xlu0 %285
  %287 = vadd.xlane.f32.xlu0 %v256
  %v288 = vpop.xlane.xlu0 %287
  %v289 = vsub.f32 %v225, %v258
  %v290 = vsub.f32 %v226, %v260
  %v291 = vsub.f32 %v227, %v262
  %v292 = vsub.f32 %v228, %v264
  %v293 = vsub.f32 %v229, %v266
  %v294 = vsub.f32 %v230, %v268
  %v295 = vsub.f32 %v231, %v270
  %v296 = vsub.f32 %v232, %v272
  %v297 = vsub.f32 %v233, %v274
  %v298 = vsub.f32 %v234, %v276
  %v299 = vsub.f32 %v235, %v278
  %v300 = vsub.f32 %v236, %v280
  %v301 = vsub.f32 %v237, %v282
  %v302 = vsub.f32 %v238, %v284
  %v303 = vsub.f32 %v239, %v286
  %v304 = vsub.f32 %v240, %v288
  %vm305 = vcmask 7168
  %v306 = vsel %vm305, %v289, 0.0
  %v307 = vsel %vm305, %v290, 0.0
  %v308 = vadd.f32 %v306, %v307
  %v309 = vsel %vm305, %v291, 0.0
  %v310 = vadd.f32 %v308, %v309
  %v311 = vsel %vm305, %v292, 0.0
  %v312 = vadd.f32 %v310, %v311
  %v313 = vsel %vm305, %v293, 0.0
  %v314 = vadd.f32 %v312, %v313
  %v315 = vsel %vm305, %v294, 0.0
  %v316 = vadd.f32 %v314, %v315
  %v317 = vsel %vm305, %v295, 0.0
  %v318 = vadd.f32 %v316, %v317
  %v319 = vsel %vm305, %v296, 0.0
  %v320 = vadd.f32 %v318, %v319
  %v321 = vsel %vm305, %v297, 0.0
  %v322 = vadd.f32 %v320, %v321
  %v323 = vsel %vm305, %v298, 0.0
  %v324 = vadd.f32 %v322, %v323
  %v325 = vsel %vm305, %v299, 0.0
  %v326 = vadd.f32 %v324, %v325
  %v327 = vsel %vm305, %v300, 0.0
  %v328 = vadd.f32 %v326, %v327
  %v329 = vsel %vm305, %v301, 0.0
  %v330 = vadd.f32 %v328, %v329
  %v331 = vsel %vm305, %v302, 0.0
  %v332 = vadd.f32 %v330, %v331
  %v333 = vsel %vm305, %v303, 0.0
  %v334 = vadd.f32 %v332, %v333
  %v335 = vsel %vm305, %v304, 0.0
  %v336 = vadd.f32 %v334, %v335
  %337 = vadd.xlane.f32.xlu0 %v336
  %v338 = vpop.xlane.xlu0 %337
  %v339 = vrot.slane %v338, 4
  %v340 = vadd.f32 %v338, %v339
  %v341 = vrot.slane %v340, 2
  %v342 = vadd.f32 %v340, %v341
  %v343 = vrot.slane %v342, 1
  %v344 = vadd.f32 %v342, %v343
  %s345 = vtos %v344
  %v346 = vstv %s345
  %v347 = vld [vmem:[%s2] sm:$0xff]
  %v348 = vld [vmem:[%s2 + $0x8] sm:$0xff]
  %v349 = vld [vmem:[%s2 + $0x10] sm:$0xff]
  %v350 = vld [vmem:[%s2 + $0x18] sm:$0xff]
  %v351 = vld [vmem:[%s2 + $0x20] sm:$0xff]
  %v352 = vld [vmem:[%s2 + $0x28] sm:$0xff]
  %v353 = vld [vmem:[%s2 + $0x30] sm:$0xff]
  %v354 = vld [vmem:[%s2 + $0x38] sm:$0xff]
  %v355 = vld [vmem:[%s2 + $0x40] sm:$0xff]
  %v356 = vld [vmem:[%s2 + $0x48] sm:$0xff]
  %v357 = vld [vmem:[%s2 + $0x50] sm:$0xff]
  %v358 = vld [vmem:[%s2 + $0x58] sm:$0xff]
  %v359 = vld [vmem:[%s2 + $0x60] sm:$0xf]
  %v360 = vld [vmem:[%s3] sm:$0xff]
  %v361 = vld [vmem:[%s3 + $0x8] sm:$0xff]
  %v362 = vld [vmem:[%s3 + $0x10] sm:$0xff]
  %v363 = vld [vmem:[%s3 + $0x18] sm:$0xff]
  %v364 = vld [vmem:[%s3 + $0x20] sm:$0xff]
  %v365 = vld [vmem:[%s3 + $0x28] sm:$0xff]
  %v366 = vld [vmem:[%s3 + $0x30] sm:$0xff]
  %v367 = vld [vmem:[%s3 + $0x38] sm:$0xff]
  %v368 = vld [vmem:[%s3 + $0x40] sm:$0xff]
  %v369 = vld [vmem:[%s3 + $0x48] sm:$0xff]
  %v370 = vld [vmem:[%s3 + $0x50] sm:$0xff]
  %v371 = vld [vmem:[%s3 + $0x58] sm:$0xff]
  %v372 = vld [vmem:[%s3 + $0x60] sm:$0xf]
  %vm373 = vcmask 1041408
  %v374 = vsel %vm373, %v361, -inf
  %v375 = vmax.f32 %v360, %v374
  %v376 = vrot.slane %v375, 4
  %v377 = vmax.f32 %v375, %v376
  %v378 = vrot.slane %v377, 2
  %v379 = vmax.f32 %v377, %v378
  %v380 = vrot.slane %v379, 1
  %v381 = vmax.f32 %v379, %v380
  %v382 = vsub.f32 %v360, %v381
  %v383 = vsub.f32 %v361, %v381
  %v384 = vmul.f32 %v382, 1.442695
  %v385 = vpow.pop %v384
  %v386 = vmul.f32 %v383, 1.442695
  %v387 = vpow.pop %v386
  %v388 = vsel %vm373, %v387, 0.0
  %v389 = vadd.f32 %v385, %v388
  %v390 = vrot.slane %v389, 4
  %v391 = vadd.f32 %v389, %v390
  %v392 = vrot.slane %v391, 2
  %v393 = vadd.f32 %v391, %v392
  %v394 = vrot.slane %v393, 1
  %v395 = vadd.f32 %v393, %v394
  %v396 = vrcp.pop %v395
  %v397 = vmul.f32 %v385, %v396
  %v398 = vmul.f32 %v387, %v396
  %v399 = vsel %vm373, %v348, -inf
  %v400 = vmax.f32 %v347, %v399
  %v401 = vrot.slane %v400, 4
  %v402 = vmax.f32 %v400, %v401
  %v403 = vrot.slane %v402, 2
  %v404 = vmax.f32 %v402, %v403
  %v405 = vrot.slane %v404, 1
  %v406 = vmax.f32 %v404, %v405
  %v407 = vsub.f32 %v347, %v406
  %v408 = vsub.f32 %v348, %v406
  %v409 = vmul.f32 %v407, 1.442695
  %v410 = vpow.pop %v409
  %v411 = vmul.f32 %v408, 1.442695
  %v412 = vpow.pop %v411
  %v413 = vsel %vm373, %v412, 0.0
  %v414 = vadd.f32 %v410, %v413
  %v415 = vrot.slane %v414, 4
  %v416 = vadd.f32 %v414, %v415
  %v417 = vrot.slane %v416, 2
  %v418 = vadd.f32 %v416, %v417
  %v419 = vrot.slane %v418, 1
  %v420 = vadd.f32 %v418, %v419
  %v421 = vlog2.pop %v420
  %v422 = vmul.f32 %v421, 0.6931472
  %v423 = vsub.f32 %v422, %v407
  %v424 = vsub.f32 %v422, %v408
  %v425 = vmul.f32 %v397, %v423
  %v426 = vmul.f32 %v398, %v424
  %v427 = vsel %vm373, %v426, 0.0
  %v428 = vadd.f32 %v425, %v427
  %v429 = vrot.slane %v428, 4
  %v430 = vadd.f32 %v428, %v429
  %v431 = vrot.slane %v430, 2
  %v432 = vadd.f32 %v430, %v431
  %v433 = vrot.slane %v432, 1
  %v434 = vadd.f32 %v432, %v433
  %v435 = vadd.f32 %v434, 0.0
  %vm436 = vcmask 1047557
  %v437 = vsel %vm436, %v360, -inf
  %vm438 = vcmask 1046528
  %v439 = vsel %vm438, %v361, -inf
  %v440 = vmax.f32 %v437, %v439
  %v441 = vrot.slane %v440, 4
  %v442 = vmax.f32 %v440, %v441
  %v443 = vrot.slane %v442, 2
  %v444 = vmax.f32 %v442, %v443
  %v445 = vrot.slane %v444, 1
  %v446 = vmax.f32 %v444, %v445
  %v447 = vsub.f32 %v360, %v446
  %v448 = vsub.f32 %v361, %v446
  %v449 = vmul.f32 %v447, 1.442695
  %v450 = vpow.pop %v449
  %v451 = vmul.f32 %v448, 1.442695
  %v452 = vpow.pop %v451
  %vm455 = vcmask 1042432
  %v456 = vrot.slane %v450, 5
  %v457 = vrot.slane %v452, 5
  %v458 = vsel %vm455, %v456, %v457
  %v461 = vsel %vm373, %v457, 0.0
  %v462 = vadd.f32 %v458, %v461
  %v463 = vrot.slane %v462, 4
  %v464 = vadd.f32 %v462, %v463
  %v465 = vrot.slane %v464, 2
  %v466 = vadd.f32 %v464, %v465
  %v467 = vrot.slane %v466, 1
  %v468 = vadd.f32 %v466, %v467
  %v469 = vrcp.pop %v468
  %v470 = vmul.f32 %v450, %v469
  %v471 = vmul.f32 %v452, %v469
  %v472 = vsel %vm436, %v347, -inf
  %v473 = vsel %vm438, %v348, -inf
  %v474 = vmax.f32 %v472, %v473
  %v475 = vrot.slane %v474, 4
  %v476 = vmax.f32 %v474, %v475
  %v477 = vrot.slane %v476, 2
  %v478 = vmax.f32 %v476, %v477
  %v479 = vrot.slane %v478, 1
  %v480 = vmax.f32 %v478, %v479
  %v481 = vsub.f32 %v347, %v480
  %v482 = vsub.f32 %v348, %v480
  %v483 = vmul.f32 %v481, 1.442695
  %v484 = vpow.pop %v483
  %v485 = vmul.f32 %v482, 1.442695
  %v486 = vpow.pop %v485
  %v489 = vrot.slane %v484, 5
  %v490 = vrot.slane %v486, 5
  %v491 = vsel %vm455, %v489, %v490
  %v494 = vsel %vm373, %v490, 0.0
  %v495 = vadd.f32 %v491, %v494
  %v496 = vrot.slane %v495, 4
  %v497 = vadd.f32 %v495, %v496
  %v498 = vrot.slane %v497, 2
  %v499 = vadd.f32 %v497, %v498
  %v500 = vrot.slane %v499, 1
  %v501 = vadd.f32 %v499, %v500
  %v502 = vlog2.pop %v501
  %v503 = vmul.f32 %v502, 0.6931472
  %v504 = vsub.f32 %v503, %v481
  %v505 = vsub.f32 %v503, %v482
  %v506 = vmul.f32 %v470, %v504
  %v507 = vmul.f32 %v471, %v505
  %v510 = vrot.slane %v506, 5
  %v511 = vrot.slane %v507, 5
  %v512 = vsel %vm455, %v510, %v511
  %v515 = vsel %vm373, %v511, 0.0
  %v516 = vadd.f32 %v512, %v515
  %v517 = vrot.slane %v516, 4
  %v518 = vadd.f32 %v516, %v517
  %v519 = vrot.slane %v518, 2
  %v520 = vadd.f32 %v518, %v519
  %v521 = vrot.slane %v520, 1
  %v522 = vadd.f32 %v520, %v521
  %v523 = vadd.f32 %v435, %v522
  %vm524 = vcmask 1047554
  %v525 = vsel %vm524, %v361, -inf
  %vm526 = vcmask 1043456
  %v527 = vsel %vm526, %v362, -inf
  %v528 = vmax.f32 %v525, %v527
  %v529 = vrot.slane %v528, 4
  %v530 = vmax.f32 %v528, %v529
  %v531 = vrot.slane %v530, 2
  %v532 = vmax.f32 %v530, %v531
  %v533 = vrot.slane %v532, 1
  %v534 = vmax.f32 %v532, %v533
  %v535 = vsub.f32 %v361, %v534
  %v536 = vsub.f32 %v362, %v534
  %v537 = vmul.f32 %v535, 1.442695
  %v538 = vpow.pop %v537
  %v539 = vmul.f32 %v536, 1.442695
  %v540 = vpow.pop %v539
  %vm543 = vcmask 1045504
  %v544 = vrot.slane %v538, 2
  %v545 = vrot.slane %v540, 2
  %v546 = vsel %vm543, %v544, %v545
  %v549 = vsel %vm373, %v545, 0.0
  %v550 = vadd.f32 %v546, %v549
  %v551 = vrot.slane %v550, 4
  %v552 = vadd.f32 %v550, %v551
  %v553 = vrot.slane %v552, 2
  %v554 = vadd.f32 %v552, %v553
  %v555 = vrot.slane %v554, 1
  %v556 = vadd.f32 %v554, %v555
  %v557 = vrcp.pop %v556
  %v558 = vmul.f32 %v538, %v557
  %v559 = vmul.f32 %v540, %v557
  %v560 = vsel %vm524, %v348, -inf
  %v561 = vsel %vm526, %v349, -inf
  %v562 = vmax.f32 %v560, %v561
  %v563 = vrot.slane %v562, 4
  %v564 = vmax.f32 %v562, %v563
  %v565 = vrot.slane %v564, 2
  %v566 = vmax.f32 %v564, %v565
  %v567 = vrot.slane %v566, 1
  %v568 = vmax.f32 %v566, %v567
  %v569 = vsub.f32 %v348, %v568
  %v570 = vsub.f32 %v349, %v568
  %v571 = vmul.f32 %v569, 1.442695
  %v572 = vpow.pop %v571
  %v573 = vmul.f32 %v570, 1.442695
  %v574 = vpow.pop %v573
  %v577 = vrot.slane %v572, 2
  %v578 = vrot.slane %v574, 2
  %v579 = vsel %vm543, %v577, %v578
  %v582 = vsel %vm373, %v578, 0.0
  %v583 = vadd.f32 %v579, %v582
  %v584 = vrot.slane %v583, 4
  %v585 = vadd.f32 %v583, %v584
  %v586 = vrot.slane %v585, 2
  %v587 = vadd.f32 %v585, %v586
  %v588 = vrot.slane %v587, 1
  %v589 = vadd.f32 %v587, %v588
  %v590 = vlog2.pop %v589
  %v591 = vmul.f32 %v590, 0.6931472
  %v592 = vsub.f32 %v591, %v569
  %v593 = vsub.f32 %v591, %v570
  %v594 = vmul.f32 %v558, %v592
  %v595 = vmul.f32 %v559, %v593
  %v598 = vrot.slane %v594, 2
  %v599 = vrot.slane %v595, 2
  %v600 = vsel %vm543, %v598, %v599
  %v603 = vsel %vm373, %v599, 0.0
  %v604 = vadd.f32 %v600, %v603
  %v605 = vrot.slane %v604, 4
  %v606 = vadd.f32 %v604, %v605
  %v607 = vrot.slane %v606, 2
  %v608 = vadd.f32 %v606, %v607
  %v609 = vrot.slane %v608, 1
  %v610 = vadd.f32 %v608, %v609
  %v611 = vadd.f32 %v523, %v610
  %vm612 = vcmask 1047559
  %v613 = vsel %vm612, %v361, -inf
  %vm614 = vcmask 1040384
  %v615 = vsel %vm614, %v363, -inf
  %v616 = vmax.f32 %v613, %v362
  %v617 = vmax.f32 %v616, %v615
  %v618 = vrot.slane %v617, 4
  %v619 = vmax.f32 %v617, %v618
  %v620 = vrot.slane %v619, 2
  %v621 = vmax.f32 %v619, %v620
  %v622 = vrot.slane %v621, 1
  %v623 = vmax.f32 %v621, %v622
  %v624 = vsub.f32 %v361, %v623
  %v625 = vsub.f32 %v362, %v623
  %v626 = vsub.f32 %v363, %v623
  %v627 = vmul.f32 %v624, 1.442695
  %v628 = vpow.pop %v627
  %v629 = vmul.f32 %v625, 1.442695
  %v630 = vpow.pop %v629
  %v631 = vmul.f32 %v626, 1.442695
  %v632 = vpow.pop %v631
  %v636 = vrot.slane %v628, 7
  %v637 = vrot.slane %v630, 7
  %v638 = vsel %vm614, %v636, %v637
  %v639 = vrot.slane %v632, 7
  %v640 = vsel %vm614, %v637, %v639
  %v643 = vsel %vm373, %v640, 0.0
  %v644 = vadd.f32 %v638, %v643
  %v645 = vrot.slane %v644, 4
  %v646 = vadd.f32 %v644, %v645
  %v647 = vrot.slane %v646, 2
  %v648 = vadd.f32 %v646, %v647
  %v649 = vrot.slane %v648, 1
  %v650 = vadd.f32 %v648, %v649
  %v651 = vrcp.pop %v650
  %v652 = vmul.f32 %v628, %v651
  %v653 = vmul.f32 %v630, %v651
  %v654 = vmul.f32 %v632, %v651
  %v655 = vsel %vm612, %v348, -inf
  %v656 = vsel %vm614, %v350, -inf
  %v657 = vmax.f32 %v655, %v349
  %v658 = vmax.f32 %v657, %v656
  %v659 = vrot.slane %v658, 4
  %v660 = vmax.f32 %v658, %v659
  %v661 = vrot.slane %v660, 2
  %v662 = vmax.f32 %v660, %v661
  %v663 = vrot.slane %v662, 1
  %v664 = vmax.f32 %v662, %v663
  %v665 = vsub.f32 %v348, %v664
  %v666 = vsub.f32 %v349, %v664
  %v667 = vsub.f32 %v350, %v664
  %v668 = vmul.f32 %v665, 1.442695
  %v669 = vpow.pop %v668
  %v670 = vmul.f32 %v666, 1.442695
  %v671 = vpow.pop %v670
  %v672 = vmul.f32 %v667, 1.442695
  %v673 = vpow.pop %v672
  %v677 = vrot.slane %v669, 7
  %v678 = vrot.slane %v671, 7
  %v679 = vsel %vm614, %v677, %v678
  %v680 = vrot.slane %v673, 7
  %v681 = vsel %vm614, %v678, %v680
  %v684 = vsel %vm373, %v681, 0.0
  %v685 = vadd.f32 %v679, %v684
  %v686 = vrot.slane %v685, 4
  %v687 = vadd.f32 %v685, %v686
  %v688 = vrot.slane %v687, 2
  %v689 = vadd.f32 %v687, %v688
  %v690 = vrot.slane %v689, 1
  %v691 = vadd.f32 %v689, %v690
  %v692 = vlog2.pop %v691
  %v693 = vmul.f32 %v692, 0.6931472
  %v694 = vsub.f32 %v693, %v665
  %v695 = vsub.f32 %v693, %v666
  %v696 = vsub.f32 %v693, %v667
  %v697 = vmul.f32 %v652, %v694
  %v698 = vmul.f32 %v653, %v695
  %v699 = vmul.f32 %v654, %v696
  %v703 = vrot.slane %v697, 7
  %v704 = vrot.slane %v698, 7
  %v705 = vsel %vm614, %v703, %v704
  %v706 = vrot.slane %v699, 7
  %v707 = vsel %vm614, %v704, %v706
  %v710 = vsel %vm373, %v707, 0.0
  %v711 = vadd.f32 %v705, %v710
  %v712 = vrot.slane %v711, 4
  %v713 = vadd.f32 %v711, %v712
  %v714 = vrot.slane %v713, 2
  %v715 = vadd.f32 %v713, %v714
  %v716 = vrot.slane %v715, 1
  %v717 = vadd.f32 %v715, %v716
  %v718 = vadd.f32 %v611, %v717
  %vm719 = vcmask 1047556
  %v720 = vsel %vm719, %v362, -inf
  %v721 = vsel %vm543, %v363, -inf
  %v722 = vmax.f32 %v720, %v721
  %v723 = vrot.slane %v722, 4
  %v724 = vmax.f32 %v722, %v723
  %v725 = vrot.slane %v724, 2
  %v726 = vmax.f32 %v724, %v725
  %v727 = vrot.slane %v726, 1
  %v728 = vmax.f32 %v726, %v727
  %v729 = vsub.f32 %v362, %v728
  %v730 = vsub.f32 %v363, %v728
  %v731 = vmul.f32 %v729, 1.442695
  %v732 = vpow.pop %v731
  %v733 = vmul.f32 %v730, 1.442695
  %v734 = vpow.pop %v733
  %v737 = vrot.slane %v732, 4
  %v738 = vrot.slane %v734, 4
  %v739 = vsel %vm526, %v737, %v738
  %v742 = vsel %vm373, %v738, 0.0
  %v743 = vadd.f32 %v739, %v742
  %v744 = vrot.slane %v743, 4
  %v745 = vadd.f32 %v743, %v744
  %v746 = vrot.slane %v745, 2
  %v747 = vadd.f32 %v745, %v746
  %v748 = vrot.slane %v747, 1
  %v749 = vadd.f32 %v747, %v748
  %v750 = vrcp.pop %v749
  %v751 = vmul.f32 %v732, %v750
  %v752 = vmul.f32 %v734, %v750
  %v753 = vsel %vm719, %v349, -inf
  %v754 = vsel %vm543, %v350, -inf
  %v755 = vmax.f32 %v753, %v754
  %v756 = vrot.slane %v755, 4
  %v757 = vmax.f32 %v755, %v756
  %v758 = vrot.slane %v757, 2
  %v759 = vmax.f32 %v757, %v758
  %v760 = vrot.slane %v759, 1
  %v761 = vmax.f32 %v759, %v760
  %v762 = vsub.f32 %v349, %v761
  %v763 = vsub.f32 %v350, %v761
  %v764 = vmul.f32 %v762, 1.442695
  %v765 = vpow.pop %v764
  %v766 = vmul.f32 %v763, 1.442695
  %v767 = vpow.pop %v766
  %v770 = vrot.slane %v765, 4
  %v771 = vrot.slane %v767, 4
  %v772 = vsel %vm526, %v770, %v771
  %v775 = vsel %vm373, %v771, 0.0
  %v776 = vadd.f32 %v772, %v775
  %v777 = vrot.slane %v776, 4
  %v778 = vadd.f32 %v776, %v777
  %v779 = vrot.slane %v778, 2
  %v780 = vadd.f32 %v778, %v779
  %v781 = vrot.slane %v780, 1
  %v782 = vadd.f32 %v780, %v781
  %v783 = vlog2.pop %v782
  %v784 = vmul.f32 %v783, 0.6931472
  %v785 = vsub.f32 %v784, %v762
  %v786 = vsub.f32 %v784, %v763
  %v787 = vmul.f32 %v751, %v785
  %v788 = vmul.f32 %v752, %v786
  %v791 = vrot.slane %v787, 4
  %v792 = vrot.slane %v788, 4
  %v793 = vsel %vm526, %v791, %v792
  %v796 = vsel %vm373, %v792, 0.0
  %v797 = vadd.f32 %v793, %v796
  %v798 = vrot.slane %v797, 4
  %v799 = vadd.f32 %v797, %v798
  %v800 = vrot.slane %v799, 2
  %v801 = vadd.f32 %v799, %v800
  %v802 = vrot.slane %v801, 1
  %v803 = vadd.f32 %v801, %v802
  %v804 = vadd.f32 %v718, %v803
  %vm805 = vcmask 1047553
  %v806 = vsel %vm805, %v363, -inf
  %v807 = vsel %vm455, %v364, -inf
  %v808 = vmax.f32 %v806, %v807
  %v809 = vrot.slane %v808, 4
  %v810 = vmax.f32 %v808, %v809
  %v811 = vrot.slane %v810, 2
  %v812 = vmax.f32 %v810, %v811
  %v813 = vrot.slane %v812, 1
  %v814 = vmax.f32 %v812, %v813
  %v815 = vsub.f32 %v363, %v814
  %v816 = vsub.f32 %v364, %v814
  %v817 = vmul.f32 %v815, 1.442695
  %v818 = vpow.pop %v817
  %v819 = vmul.f32 %v816, 1.442695
  %v820 = vpow.pop %v819
  %v823 = vrot.slane %v818, 1
  %v824 = vrot.slane %v820, 1
  %v825 = vsel %vm438, %v823, %v824
  %v828 = vsel %vm373, %v824, 0.0
  %v829 = vadd.f32 %v825, %v828
  %v830 = vrot.slane %v829, 4
  %v831 = vadd.f32 %v829, %v830
  %v832 = vrot.slane %v831, 2
  %v833 = vadd.f32 %v831, %v832
  %v834 = vrot.slane %v833, 1
  %v835 = vadd.f32 %v833, %v834
  %v836 = vrcp.pop %v835
  %v837 = vmul.f32 %v818, %v836
  %v838 = vmul.f32 %v820, %v836
  %v839 = vsel %vm805, %v350, -inf
  %v840 = vsel %vm455, %v351, -inf
  %v841 = vmax.f32 %v839, %v840
  %v842 = vrot.slane %v841, 4
  %v843 = vmax.f32 %v841, %v842
  %v844 = vrot.slane %v843, 2
  %v845 = vmax.f32 %v843, %v844
  %v846 = vrot.slane %v845, 1
  %v847 = vmax.f32 %v845, %v846
  %v848 = vsub.f32 %v350, %v847
  %v849 = vsub.f32 %v351, %v847
  %v850 = vmul.f32 %v848, 1.442695
  %v851 = vpow.pop %v850
  %v852 = vmul.f32 %v849, 1.442695
  %v853 = vpow.pop %v852
  %v856 = vrot.slane %v851, 1
  %v857 = vrot.slane %v853, 1
  %v858 = vsel %vm438, %v856, %v857
  %v861 = vsel %vm373, %v857, 0.0
  %v862 = vadd.f32 %v858, %v861
  %v863 = vrot.slane %v862, 4
  %v864 = vadd.f32 %v862, %v863
  %v865 = vrot.slane %v864, 2
  %v866 = vadd.f32 %v864, %v865
  %v867 = vrot.slane %v866, 1
  %v868 = vadd.f32 %v866, %v867
  %v869 = vlog2.pop %v868
  %v870 = vmul.f32 %v869, 0.6931472
  %v871 = vsub.f32 %v870, %v848
  %v872 = vsub.f32 %v870, %v849
  %v873 = vmul.f32 %v837, %v871
  %v874 = vmul.f32 %v838, %v872
  %v877 = vrot.slane %v873, 1
  %v878 = vrot.slane %v874, 1
  %v879 = vsel %vm438, %v877, %v878
  %v882 = vsel %vm373, %v878, 0.0
  %v883 = vadd.f32 %v879, %v882
  %v884 = vrot.slane %v883, 4
  %v885 = vadd.f32 %v883, %v884
  %v886 = vrot.slane %v885, 2
  %v887 = vadd.f32 %v885, %v886
  %v888 = vrot.slane %v887, 1
  %v889 = vadd.f32 %v887, %v888
  %v890 = vadd.f32 %v804, %v889
  %vm891 = vcmask 1047558
  %v892 = vsel %vm891, %v363, -inf
  %v893 = vmax.f32 %v892, %v364
  %v894 = vrot.slane %v893, 4
  %v895 = vmax.f32 %v893, %v894
  %v896 = vrot.slane %v895, 2
  %v897 = vmax.f32 %v895, %v896
  %v898 = vrot.slane %v897, 1
  %v899 = vmax.f32 %v897, %v898
  %v900 = vsub.f32 %v363, %v899
  %v901 = vsub.f32 %v364, %v899
  %v902 = vmul.f32 %v900, 1.442695
  %v903 = vpow.pop %v902
  %v904 = vmul.f32 %v901, 1.442695
  %v905 = vpow.pop %v904
  %v908 = vrot.slane %v903, 6
  %v909 = vrot.slane %v905, 6
  %v910 = vsel %vm373, %v908, %v909
  %v913 = vsel %vm373, %v909, 0.0
  %v914 = vadd.f32 %v910, %v913
  %v915 = vrot.slane %v914, 4
  %v916 = vadd.f32 %v914, %v915
  %v917 = vrot.slane %v916, 2
  %v918 = vadd.f32 %v916, %v917
  %v919 = vrot.slane %v918, 1
  %v920 = vadd.f32 %v918, %v919
  %v921 = vrcp.pop %v920
  %v922 = vmul.f32 %v903, %v921
  %v923 = vmul.f32 %v905, %v921
  %v924 = vsel %vm891, %v350, -inf
  %v925 = vmax.f32 %v924, %v351
  %v926 = vrot.slane %v925, 4
  %v927 = vmax.f32 %v925, %v926
  %v928 = vrot.slane %v927, 2
  %v929 = vmax.f32 %v927, %v928
  %v930 = vrot.slane %v929, 1
  %v931 = vmax.f32 %v929, %v930
  %v932 = vsub.f32 %v350, %v931
  %v933 = vsub.f32 %v351, %v931
  %v934 = vmul.f32 %v932, 1.442695
  %v935 = vpow.pop %v934
  %v936 = vmul.f32 %v933, 1.442695
  %v937 = vpow.pop %v936
  %v940 = vrot.slane %v935, 6
  %v941 = vrot.slane %v937, 6
  %v942 = vsel %vm373, %v940, %v941
  %v945 = vsel %vm373, %v941, 0.0
  %v946 = vadd.f32 %v942, %v945
  %v947 = vrot.slane %v946, 4
  %v948 = vadd.f32 %v946, %v947
  %v949 = vrot.slane %v948, 2
  %v950 = vadd.f32 %v948, %v949
  %v951 = vrot.slane %v950, 1
  %v952 = vadd.f32 %v950, %v951
  %v953 = vlog2.pop %v952
  %v954 = vmul.f32 %v953, 0.6931472
  %v955 = vsub.f32 %v954, %v932
  %v956 = vsub.f32 %v954, %v933
  %v957 = vmul.f32 %v922, %v955
  %v958 = vmul.f32 %v923, %v956
  %v961 = vrot.slane %v957, 6
  %v962 = vrot.slane %v958, 6
  %v963 = vsel %vm373, %v961, %v962
  %v966 = vsel %vm373, %v962, 0.0
  %v967 = vadd.f32 %v963, %v966
  %v968 = vrot.slane %v967, 4
  %v969 = vadd.f32 %v967, %v968
  %v970 = vrot.slane %v969, 2
  %v971 = vadd.f32 %v969, %v970
  %v972 = vrot.slane %v971, 1
  %v973 = vadd.f32 %v971, %v972
  %v974 = vadd.f32 %v890, %v973
  %vm975 = vcmask 1047555
  %v976 = vsel %vm975, %v364, -inf
  %vm977 = vcmask 1044480
  %v978 = vsel %vm977, %v365, -inf
  %v979 = vmax.f32 %v976, %v978
  %v980 = vrot.slane %v979, 4
  %v981 = vmax.f32 %v979, %v980
  %v982 = vrot.slane %v981, 2
  %v983 = vmax.f32 %v981, %v982
  %v984 = vrot.slane %v983, 1
  %v985 = vmax.f32 %v983, %v984
  %v986 = vsub.f32 %v364, %v985
  %v987 = vsub.f32 %v365, %v985
  %v988 = vmul.f32 %v986, 1.442695
  %v989 = vpow.pop %v988
  %v990 = vmul.f32 %v987, 1.442695
  %v991 = vpow.pop %v990
  %v994 = vrot.slane %v989, 3
  %v995 = vrot.slane %v991, 3
  %v996 = vsel %vm977, %v994, %v995
  %v999 = vsel %vm373, %v995, 0.0
  %v1000 = vadd.f32 %v996, %v999
  %v1001 = vrot.slane %v1000, 4
  %v1002 = vadd.f32 %v1000, %v1001
  %v1003 = vrot.slane %v1002, 2
  %v1004 = vadd.f32 %v1002, %v1003
  %v1005 = vrot.slane %v1004, 1
  %v1006 = vadd.f32 %v1004, %v1005
  %v1007 = vrcp.pop %v1006
  %v1008 = vmul.f32 %v989, %v1007
  %v1009 = vmul.f32 %v991, %v1007
  %v1010 = vsel %vm975, %v351, -inf
  %v1011 = vsel %vm977, %v352, -inf
  %v1012 = vmax.f32 %v1010, %v1011
  %v1013 = vrot.slane %v1012, 4
  %v1014 = vmax.f32 %v1012, %v1013
  %v1015 = vrot.slane %v1014, 2
  %v1016 = vmax.f32 %v1014, %v1015
  %v1017 = vrot.slane %v1016, 1
  %v1018 = vmax.f32 %v1016, %v1017
  %v1019 = vsub.f32 %v351, %v1018
  %v1020 = vsub.f32 %v352, %v1018
  %v1021 = vmul.f32 %v1019, 1.442695
  %v1022 = vpow.pop %v1021
  %v1023 = vmul.f32 %v1020, 1.442695
  %v1024 = vpow.pop %v1023
  %v1027 = vrot.slane %v1022, 3
  %v1028 = vrot.slane %v1024, 3
  %v1029 = vsel %vm977, %v1027, %v1028
  %v1032 = vsel %vm373, %v1028, 0.0
  %v1033 = vadd.f32 %v1029, %v1032
  %v1034 = vrot.slane %v1033, 4
  %v1035 = vadd.f32 %v1033, %v1034
  %v1036 = vrot.slane %v1035, 2
  %v1037 = vadd.f32 %v1035, %v1036
  %v1038 = vrot.slane %v1037, 1
  %v1039 = vadd.f32 %v1037, %v1038
  %v1040 = vlog2.pop %v1039
  %v1041 = vmul.f32 %v1040, 0.6931472
  %v1042 = vsub.f32 %v1041, %v1019
  %v1043 = vsub.f32 %v1041, %v1020
  %v1044 = vmul.f32 %v1008, %v1042
  %v1045 = vmul.f32 %v1009, %v1043
  %v1048 = vrot.slane %v1044, 3
  %v1049 = vrot.slane %v1045, 3
  %v1050 = vsel %vm977, %v1048, %v1049
  %v1053 = vsel %vm373, %v1049, 0.0
  %v1054 = vadd.f32 %v1050, %v1053
  %v1055 = vrot.slane %v1054, 4
  %v1056 = vadd.f32 %v1054, %v1055
  %v1057 = vrot.slane %v1056, 2
  %v1058 = vadd.f32 %v1056, %v1057
  %v1059 = vrot.slane %v1058, 1
  %v1060 = vadd.f32 %v1058, %v1059
  %v1061 = vadd.f32 %v974, %v1060
  %v1062 = vsel %vm373, %v366, -inf
  %v1063 = vmax.f32 %v365, %v1062
  %v1064 = vrot.slane %v1063, 4
  %v1065 = vmax.f32 %v1063, %v1064
  %v1066 = vrot.slane %v1065, 2
  %v1067 = vmax.f32 %v1065, %v1066
  %v1068 = vrot.slane %v1067, 1
  %v1069 = vmax.f32 %v1067, %v1068
  %v1070 = vsub.f32 %v365, %v1069
  %v1071 = vsub.f32 %v366, %v1069
  %v1072 = vmul.f32 %v1070, 1.442695
  %v1073 = vpow.pop %v1072
  %v1074 = vmul.f32 %v1071, 1.442695
  %v1075 = vpow.pop %v1074
  %v1076 = vsel %vm373, %v1075, 0.0
  %v1077 = vadd.f32 %v1073, %v1076
  %v1078 = vrot.slane %v1077, 4
  %v1079 = vadd.f32 %v1077, %v1078
  %v1080 = vrot.slane %v1079, 2
  %v1081 = vadd.f32 %v1079, %v1080
  %v1082 = vrot.slane %v1081, 1
  %v1083 = vadd.f32 %v1081, %v1082
  %v1084 = vrcp.pop %v1083
  %v1085 = vmul.f32 %v1073, %v1084
  %v1086 = vmul.f32 %v1075, %v1084
  %v1087 = vsel %vm373, %v353, -inf
  %v1088 = vmax.f32 %v352, %v1087
  %v1089 = vrot.slane %v1088, 4
  %v1090 = vmax.f32 %v1088, %v1089
  %v1091 = vrot.slane %v1090, 2
  %v1092 = vmax.f32 %v1090, %v1091
  %v1093 = vrot.slane %v1092, 1
  %v1094 = vmax.f32 %v1092, %v1093
  %v1095 = vsub.f32 %v352, %v1094
  %v1096 = vsub.f32 %v353, %v1094
  %v1097 = vmul.f32 %v1095, 1.442695
  %v1098 = vpow.pop %v1097
  %v1099 = vmul.f32 %v1096, 1.442695
  %v1100 = vpow.pop %v1099
  %v1101 = vsel %vm373, %v1100, 0.0
  %v1102 = vadd.f32 %v1098, %v1101
  %v1103 = vrot.slane %v1102, 4
  %v1104 = vadd.f32 %v1102, %v1103
  %v1105 = vrot.slane %v1104, 2
  %v1106 = vadd.f32 %v1104, %v1105
  %v1107 = vrot.slane %v1106, 1
  %v1108 = vadd.f32 %v1106, %v1107
  %v1109 = vlog2.pop %v1108
  %v1110 = vmul.f32 %v1109, 0.6931472
  %v1111 = vsub.f32 %v1110, %v1095
  %v1112 = vsub.f32 %v1110, %v1096
  %v1113 = vmul.f32 %v1085, %v1111
  %v1114 = vmul.f32 %v1086, %v1112
  %v1115 = vsel %vm373, %v1114, 0.0
  %v1116 = vadd.f32 %v1113, %v1115
  %v1117 = vrot.slane %v1116, 4
  %v1118 = vadd.f32 %v1116, %v1117
  %v1119 = vrot.slane %v1118, 2
  %v1120 = vadd.f32 %v1118, %v1119
  %v1121 = vrot.slane %v1120, 1
  %v1122 = vadd.f32 %v1120, %v1121
  %v1123 = vadd.f32 %v1061, %v1122
  %v1124 = vsel %vm436, %v365, -inf
  %v1125 = vsel %vm438, %v366, -inf
  %v1126 = vmax.f32 %v1124, %v1125
  %v1127 = vrot.slane %v1126, 4
  %v1128 = vmax.f32 %v1126, %v1127
  %v1129 = vrot.slane %v1128, 2
  %v1130 = vmax.f32 %v1128, %v1129
  %v1131 = vrot.slane %v1130, 1
  %v1132 = vmax.f32 %v1130, %v1131
  %v1133 = vsub.f32 %v365, %v1132
  %v1134 = vsub.f32 %v366, %v1132
  %v1135 = vmul.f32 %v1133, 1.442695
  %v1136 = vpow.pop %v1135
  %v1137 = vmul.f32 %v1134, 1.442695
  %v1138 = vpow.pop %v1137
  %v1141 = vrot.slane %v1136, 5
  %v1142 = vrot.slane %v1138, 5
  %v1143 = vsel %vm455, %v1141, %v1142
  %v1146 = vsel %vm373, %v1142, 0.0
  %v1147 = vadd.f32 %v1143, %v1146
  %v1148 = vrot.slane %v1147, 4
  %v1149 = vadd.f32 %v1147, %v1148
  %v1150 = vrot.slane %v1149, 2
  %v1151 = vadd.f32 %v1149, %v1150
  %v1152 = vrot.slane %v1151, 1
  %v1153 = vadd.f32 %v1151, %v1152
  %v1154 = vrcp.pop %v1153
  %v1155 = vmul.f32 %v1136, %v1154
  %v1156 = vmul.f32 %v1138, %v1154
  %v1157 = vsel %vm436, %v352, -inf
  %v1158 = vsel %vm438, %v353, -inf
  %v1159 = vmax.f32 %v1157, %v1158
  %v1160 = vrot.slane %v1159, 4
  %v1161 = vmax.f32 %v1159, %v1160
  %v1162 = vrot.slane %v1161, 2
  %v1163 = vmax.f32 %v1161, %v1162
  %v1164 = vrot.slane %v1163, 1
  %v1165 = vmax.f32 %v1163, %v1164
  %v1166 = vsub.f32 %v352, %v1165
  %v1167 = vsub.f32 %v353, %v1165
  %v1168 = vmul.f32 %v1166, 1.442695
  %v1169 = vpow.pop %v1168
  %v1170 = vmul.f32 %v1167, 1.442695
  %v1171 = vpow.pop %v1170
  %v1174 = vrot.slane %v1169, 5
  %v1175 = vrot.slane %v1171, 5
  %v1176 = vsel %vm455, %v1174, %v1175
  %v1179 = vsel %vm373, %v1175, 0.0
  %v1180 = vadd.f32 %v1176, %v1179
  %v1181 = vrot.slane %v1180, 4
  %v1182 = vadd.f32 %v1180, %v1181
  %v1183 = vrot.slane %v1182, 2
  %v1184 = vadd.f32 %v1182, %v1183
  %v1185 = vrot.slane %v1184, 1
  %v1186 = vadd.f32 %v1184, %v1185
  %v1187 = vlog2.pop %v1186
  %v1188 = vmul.f32 %v1187, 0.6931472
  %v1189 = vsub.f32 %v1188, %v1166
  %v1190 = vsub.f32 %v1188, %v1167
  %v1191 = vmul.f32 %v1155, %v1189
  %v1192 = vmul.f32 %v1156, %v1190
  %v1195 = vrot.slane %v1191, 5
  %v1196 = vrot.slane %v1192, 5
  %v1197 = vsel %vm455, %v1195, %v1196
  %v1200 = vsel %vm373, %v1196, 0.0
  %v1201 = vadd.f32 %v1197, %v1200
  %v1202 = vrot.slane %v1201, 4
  %v1203 = vadd.f32 %v1201, %v1202
  %v1204 = vrot.slane %v1203, 2
  %v1205 = vadd.f32 %v1203, %v1204
  %v1206 = vrot.slane %v1205, 1
  %v1207 = vadd.f32 %v1205, %v1206
  %v1208 = vadd.f32 %v1123, %v1207
  %v1209 = vsel %vm524, %v366, -inf
  %v1210 = vsel %vm526, %v367, -inf
  %v1211 = vmax.f32 %v1209, %v1210
  %v1212 = vrot.slane %v1211, 4
  %v1213 = vmax.f32 %v1211, %v1212
  %v1214 = vrot.slane %v1213, 2
  %v1215 = vmax.f32 %v1213, %v1214
  %v1216 = vrot.slane %v1215, 1
  %v1217 = vmax.f32 %v1215, %v1216
  %v1218 = vsub.f32 %v366, %v1217
  %v1219 = vsub.f32 %v367, %v1217
  %v1220 = vmul.f32 %v1218, 1.442695
  %v1221 = vpow.pop %v1220
  %v1222 = vmul.f32 %v1219, 1.442695
  %v1223 = vpow.pop %v1222
  %v1226 = vrot.slane %v1221, 2
  %v1227 = vrot.slane %v1223, 2
  %v1228 = vsel %vm543, %v1226, %v1227
  %v1231 = vsel %vm373, %v1227, 0.0
  %v1232 = vadd.f32 %v1228, %v1231
  %v1233 = vrot.slane %v1232, 4
  %v1234 = vadd.f32 %v1232, %v1233
  %v1235 = vrot.slane %v1234, 2
  %v1236 = vadd.f32 %v1234, %v1235
  %v1237 = vrot.slane %v1236, 1
  %v1238 = vadd.f32 %v1236, %v1237
  %v1239 = vrcp.pop %v1238
  %v1240 = vmul.f32 %v1221, %v1239
  %v1241 = vmul.f32 %v1223, %v1239
  %v1242 = vsel %vm524, %v353, -inf
  %v1243 = vsel %vm526, %v354, -inf
  %v1244 = vmax.f32 %v1242, %v1243
  %v1245 = vrot.slane %v1244, 4
  %v1246 = vmax.f32 %v1244, %v1245
  %v1247 = vrot.slane %v1246, 2
  %v1248 = vmax.f32 %v1246, %v1247
  %v1249 = vrot.slane %v1248, 1
  %v1250 = vmax.f32 %v1248, %v1249
  %v1251 = vsub.f32 %v353, %v1250
  %v1252 = vsub.f32 %v354, %v1250
  %v1253 = vmul.f32 %v1251, 1.442695
  %v1254 = vpow.pop %v1253
  %v1255 = vmul.f32 %v1252, 1.442695
  %v1256 = vpow.pop %v1255
  %v1259 = vrot.slane %v1254, 2
  %v1260 = vrot.slane %v1256, 2
  %v1261 = vsel %vm543, %v1259, %v1260
  %v1264 = vsel %vm373, %v1260, 0.0
  %v1265 = vadd.f32 %v1261, %v1264
  %v1266 = vrot.slane %v1265, 4
  %v1267 = vadd.f32 %v1265, %v1266
  %v1268 = vrot.slane %v1267, 2
  %v1269 = vadd.f32 %v1267, %v1268
  %v1270 = vrot.slane %v1269, 1
  %v1271 = vadd.f32 %v1269, %v1270
  %v1272 = vlog2.pop %v1271
  %v1273 = vmul.f32 %v1272, 0.6931472
  %v1274 = vsub.f32 %v1273, %v1251
  %v1275 = vsub.f32 %v1273, %v1252
  %v1276 = vmul.f32 %v1240, %v1274
  %v1277 = vmul.f32 %v1241, %v1275
  %v1280 = vrot.slane %v1276, 2
  %v1281 = vrot.slane %v1277, 2
  %v1282 = vsel %vm543, %v1280, %v1281
  %v1285 = vsel %vm373, %v1281, 0.0
  %v1286 = vadd.f32 %v1282, %v1285
  %v1287 = vrot.slane %v1286, 4
  %v1288 = vadd.f32 %v1286, %v1287
  %v1289 = vrot.slane %v1288, 2
  %v1290 = vadd.f32 %v1288, %v1289
  %v1291 = vrot.slane %v1290, 1
  %v1292 = vadd.f32 %v1290, %v1291
  %v1293 = vadd.f32 %v1208, %v1292
  %v1294 = vsel %vm612, %v366, -inf
  %v1295 = vsel %vm614, %v368, -inf
  %v1296 = vmax.f32 %v1294, %v367
  %v1297 = vmax.f32 %v1296, %v1295
  %v1298 = vrot.slane %v1297, 4
  %v1299 = vmax.f32 %v1297, %v1298
  %v1300 = vrot.slane %v1299, 2
  %v1301 = vmax.f32 %v1299, %v1300
  %v1302 = vrot.slane %v1301, 1
  %v1303 = vmax.f32 %v1301, %v1302
  %v1304 = vsub.f32 %v366, %v1303
  %v1305 = vsub.f32 %v367, %v1303
  %v1306 = vsub.f32 %v368, %v1303
  %v1307 = vmul.f32 %v1304, 1.442695
  %v1308 = vpow.pop %v1307
  %v1309 = vmul.f32 %v1305, 1.442695
  %v1310 = vpow.pop %v1309
  %v1311 = vmul.f32 %v1306, 1.442695
  %v1312 = vpow.pop %v1311
  %v1316 = vrot.slane %v1308, 7
  %v1317 = vrot.slane %v1310, 7
  %v1318 = vsel %vm614, %v1316, %v1317
  %v1319 = vrot.slane %v1312, 7
  %v1320 = vsel %vm614, %v1317, %v1319
  %v1323 = vsel %vm373, %v1320, 0.0
  %v1324 = vadd.f32 %v1318, %v1323
  %v1325 = vrot.slane %v1324, 4
  %v1326 = vadd.f32 %v1324, %v1325
  %v1327 = vrot.slane %v1326, 2
  %v1328 = vadd.f32 %v1326, %v1327
  %v1329 = vrot.slane %v1328, 1
  %v1330 = vadd.f32 %v1328, %v1329
  %v1331 = vrcp.pop %v1330
  %v1332 = vmul.f32 %v1308, %v1331
  %v1333 = vmul.f32 %v1310, %v1331
  %v1334 = vmul.f32 %v1312, %v1331
  %v1335 = vsel %vm612, %v353, -inf
  %v1336 = vsel %vm614, %v355, -inf
  %v1337 = vmax.f32 %v1335, %v354
  %v1338 = vmax.f32 %v1337, %v1336
  %v1339 = vrot.slane %v1338, 4
  %v1340 = vmax.f32 %v1338, %v1339
  %v1341 = vrot.slane %v1340, 2
  %v1342 = vmax.f32 %v1340, %v1341
  %v1343 = vrot.slane %v1342, 1
  %v1344 = vmax.f32 %v1342, %v1343
  %v1345 = vsub.f32 %v353, %v1344
  %v1346 = vsub.f32 %v354, %v1344
  %v1347 = vsub.f32 %v355, %v1344
  %v1348 = vmul.f32 %v1345, 1.442695
  %v1349 = vpow.pop %v1348
  %v1350 = vmul.f32 %v1346, 1.442695
  %v1351 = vpow.pop %v1350
  %v1352 = vmul.f32 %v1347, 1.442695
  %v1353 = vpow.pop %v1352
  %v1357 = vrot.slane %v1349, 7
  %v1358 = vrot.slane %v1351, 7
  %v1359 = vsel %vm614, %v1357, %v1358
  %v1360 = vrot.slane %v1353, 7
  %v1361 = vsel %vm614, %v1358, %v1360
  %v1364 = vsel %vm373, %v1361, 0.0
  %v1365 = vadd.f32 %v1359, %v1364
  %v1366 = vrot.slane %v1365, 4
  %v1367 = vadd.f32 %v1365, %v1366
  %v1368 = vrot.slane %v1367, 2
  %v1369 = vadd.f32 %v1367, %v1368
  %v1370 = vrot.slane %v1369, 1
  %v1371 = vadd.f32 %v1369, %v1370
  %v1372 = vlog2.pop %v1371
  %v1373 = vmul.f32 %v1372, 0.6931472
  %v1374 = vsub.f32 %v1373, %v1345
  %v1375 = vsub.f32 %v1373, %v1346
  %v1376 = vsub.f32 %v1373, %v1347
  %v1377 = vmul.f32 %v1332, %v1374
  %v1378 = vmul.f32 %v1333, %v1375
  %v1379 = vmul.f32 %v1334, %v1376
  %v1383 = vrot.slane %v1377, 7
  %v1384 = vrot.slane %v1378, 7
  %v1385 = vsel %vm614, %v1383, %v1384
  %v1386 = vrot.slane %v1379, 7
  %v1387 = vsel %vm614, %v1384, %v1386
  %v1390 = vsel %vm373, %v1387, 0.0
  %v1391 = vadd.f32 %v1385, %v1390
  %v1392 = vrot.slane %v1391, 4
  %v1393 = vadd.f32 %v1391, %v1392
  %v1394 = vrot.slane %v1393, 2
  %v1395 = vadd.f32 %v1393, %v1394
  %v1396 = vrot.slane %v1395, 1
  %v1397 = vadd.f32 %v1395, %v1396
  %v1398 = vadd.f32 %v1293, %v1397
  %v1399 = vsel %vm719, %v367, -inf
  %v1400 = vsel %vm543, %v368, -inf
  %v1401 = vmax.f32 %v1399, %v1400
  %v1402 = vrot.slane %v1401, 4
  %v1403 = vmax.f32 %v1401, %v1402
  %v1404 = vrot.slane %v1403, 2
  %v1405 = vmax.f32 %v1403, %v1404
  %v1406 = vrot.slane %v1405, 1
  %v1407 = vmax.f32 %v1405, %v1406
  %v1408 = vsub.f32 %v367, %v1407
  %v1409 = vsub.f32 %v368, %v1407
  %v1410 = vmul.f32 %v1408, 1.442695
  %v1411 = vpow.pop %v1410
  %v1412 = vmul.f32 %v1409, 1.442695
  %v1413 = vpow.pop %v1412
  %v1416 = vrot.slane %v1411, 4
  %v1417 = vrot.slane %v1413, 4
  %v1418 = vsel %vm526, %v1416, %v1417
  %v1421 = vsel %vm373, %v1417, 0.0
  %v1422 = vadd.f32 %v1418, %v1421
  %v1423 = vrot.slane %v1422, 4
  %v1424 = vadd.f32 %v1422, %v1423
  %v1425 = vrot.slane %v1424, 2
  %v1426 = vadd.f32 %v1424, %v1425
  %v1427 = vrot.slane %v1426, 1
  %v1428 = vadd.f32 %v1426, %v1427
  %v1429 = vrcp.pop %v1428
  %v1430 = vmul.f32 %v1411, %v1429
  %v1431 = vmul.f32 %v1413, %v1429
  %v1432 = vsel %vm719, %v354, -inf
  %v1433 = vsel %vm543, %v355, -inf
  %v1434 = vmax.f32 %v1432, %v1433
  %v1435 = vrot.slane %v1434, 4
  %v1436 = vmax.f32 %v1434, %v1435
  %v1437 = vrot.slane %v1436, 2
  %v1438 = vmax.f32 %v1436, %v1437
  %v1439 = vrot.slane %v1438, 1
  %v1440 = vmax.f32 %v1438, %v1439
  %v1441 = vsub.f32 %v354, %v1440
  %v1442 = vsub.f32 %v355, %v1440
  %v1443 = vmul.f32 %v1441, 1.442695
  %v1444 = vpow.pop %v1443
  %v1445 = vmul.f32 %v1442, 1.442695
  %v1446 = vpow.pop %v1445
  %v1449 = vrot.slane %v1444, 4
  %v1450 = vrot.slane %v1446, 4
  %v1451 = vsel %vm526, %v1449, %v1450
  %v1454 = vsel %vm373, %v1450, 0.0
  %v1455 = vadd.f32 %v1451, %v1454
  %v1456 = vrot.slane %v1455, 4
  %v1457 = vadd.f32 %v1455, %v1456
  %v1458 = vrot.slane %v1457, 2
  %v1459 = vadd.f32 %v1457, %v1458
  %v1460 = vrot.slane %v1459, 1
  %v1461 = vadd.f32 %v1459, %v1460
  %v1462 = vlog2.pop %v1461
  %v1463 = vmul.f32 %v1462, 0.6931472
  %v1464 = vsub.f32 %v1463, %v1441
  %v1465 = vsub.f32 %v1463, %v1442
  %v1466 = vmul.f32 %v1430, %v1464
  %v1467 = vmul.f32 %v1431, %v1465
  %v1470 = vrot.slane %v1466, 4
  %v1471 = vrot.slane %v1467, 4
  %v1472 = vsel %vm526, %v1470, %v1471
  %v1475 = vsel %vm373, %v1471, 0.0
  %v1476 = vadd.f32 %v1472, %v1475
  %v1477 = vrot.slane %v1476, 4
  %v1478 = vadd.f32 %v1476, %v1477
  %v1479 = vrot.slane %v1478, 2
  %v1480 = vadd.f32 %v1478, %v1479
  %v1481 = vrot.slane %v1480, 1
  %v1482 = vadd.f32 %v1480, %v1481
  %v1483 = vadd.f32 %v1398, %v1482
  %v1484 = vsel %vm805, %v368, -inf
  %v1485 = vsel %vm455, %v369, -inf
  %v1486 = vmax.f32 %v1484, %v1485
  %v1487 = vrot.slane %v1486, 4
  %v1488 = vmax.f32 %v1486, %v1487
  %v1489 = vrot.slane %v1488, 2
  %v1490 = vmax.f32 %v1488, %v1489
  %v1491 = vrot.slane %v1490, 1
  %v1492 = vmax.f32 %v1490, %v1491
  %v1493 = vsub.f32 %v368, %v1492
  %v1494 = vsub.f32 %v369, %v1492
  %v1495 = vmul.f32 %v1493, 1.442695
  %v1496 = vpow.pop %v1495
  %v1497 = vmul.f32 %v1494, 1.442695
  %v1498 = vpow.pop %v1497
  %v1501 = vrot.slane %v1496, 1
  %v1502 = vrot.slane %v1498, 1
  %v1503 = vsel %vm438, %v1501, %v1502
  %v1506 = vsel %vm373, %v1502, 0.0
  %v1507 = vadd.f32 %v1503, %v1506
  %v1508 = vrot.slane %v1507, 4
  %v1509 = vadd.f32 %v1507, %v1508
  %v1510 = vrot.slane %v1509, 2
  %v1511 = vadd.f32 %v1509, %v1510
  %v1512 = vrot.slane %v1511, 1
  %v1513 = vadd.f32 %v1511, %v1512
  %v1514 = vrcp.pop %v1513
  %v1515 = vmul.f32 %v1496, %v1514
  %v1516 = vmul.f32 %v1498, %v1514
  %v1517 = vsel %vm805, %v355, -inf
  %v1518 = vsel %vm455, %v356, -inf
  %v1519 = vmax.f32 %v1517, %v1518
  %v1520 = vrot.slane %v1519, 4
  %v1521 = vmax.f32 %v1519, %v1520
  %v1522 = vrot.slane %v1521, 2
  %v1523 = vmax.f32 %v1521, %v1522
  %v1524 = vrot.slane %v1523, 1
  %v1525 = vmax.f32 %v1523, %v1524
  %v1526 = vsub.f32 %v355, %v1525
  %v1527 = vsub.f32 %v356, %v1525
  %v1528 = vmul.f32 %v1526, 1.442695
  %v1529 = vpow.pop %v1528
  %v1530 = vmul.f32 %v1527, 1.442695
  %v1531 = vpow.pop %v1530
  %v1534 = vrot.slane %v1529, 1
  %v1535 = vrot.slane %v1531, 1
  %v1536 = vsel %vm438, %v1534, %v1535
  %v1539 = vsel %vm373, %v1535, 0.0
  %v1540 = vadd.f32 %v1536, %v1539
  %v1541 = vrot.slane %v1540, 4
  %v1542 = vadd.f32 %v1540, %v1541
  %v1543 = vrot.slane %v1542, 2
  %v1544 = vadd.f32 %v1542, %v1543
  %v1545 = vrot.slane %v1544, 1
  %v1546 = vadd.f32 %v1544, %v1545
  %v1547 = vlog2.pop %v1546
  %v1548 = vmul.f32 %v1547, 0.6931472
  %v1549 = vsub.f32 %v1548, %v1526
  %v1550 = vsub.f32 %v1548, %v1527
  %v1551 = vmul.f32 %v1515, %v1549
  %v1552 = vmul.f32 %v1516, %v1550
  %v1555 = vrot.slane %v1551, 1
  %v1556 = vrot.slane %v1552, 1
  %v1557 = vsel %vm438, %v1555, %v1556
  %v1560 = vsel %vm373, %v1556, 0.0
  %v1561 = vadd.f32 %v1557, %v1560
  %v1562 = vrot.slane %v1561, 4
  %v1563 = vadd.f32 %v1561, %v1562
  %v1564 = vrot.slane %v1563, 2
  %v1565 = vadd.f32 %v1563, %v1564
  %v1566 = vrot.slane %v1565, 1
  %v1567 = vadd.f32 %v1565, %v1566
  %v1568 = vadd.f32 %v1483, %v1567
  %v1569 = vsel %vm891, %v368, -inf
  %v1570 = vmax.f32 %v1569, %v369
  %v1571 = vrot.slane %v1570, 4
  %v1572 = vmax.f32 %v1570, %v1571
  %v1573 = vrot.slane %v1572, 2
  %v1574 = vmax.f32 %v1572, %v1573
  %v1575 = vrot.slane %v1574, 1
  %v1576 = vmax.f32 %v1574, %v1575
  %v1577 = vsub.f32 %v368, %v1576
  %v1578 = vsub.f32 %v369, %v1576
  %v1579 = vmul.f32 %v1577, 1.442695
  %v1580 = vpow.pop %v1579
  %v1581 = vmul.f32 %v1578, 1.442695
  %v1582 = vpow.pop %v1581
  %v1585 = vrot.slane %v1580, 6
  %v1586 = vrot.slane %v1582, 6
  %v1587 = vsel %vm373, %v1585, %v1586
  %v1590 = vsel %vm373, %v1586, 0.0
  %v1591 = vadd.f32 %v1587, %v1590
  %v1592 = vrot.slane %v1591, 4
  %v1593 = vadd.f32 %v1591, %v1592
  %v1594 = vrot.slane %v1593, 2
  %v1595 = vadd.f32 %v1593, %v1594
  %v1596 = vrot.slane %v1595, 1
  %v1597 = vadd.f32 %v1595, %v1596
  %v1598 = vrcp.pop %v1597
  %v1599 = vmul.f32 %v1580, %v1598
  %v1600 = vmul.f32 %v1582, %v1598
  %v1601 = vsel %vm891, %v355, -inf
  %v1602 = vmax.f32 %v1601, %v356
  %v1603 = vrot.slane %v1602, 4
  %v1604 = vmax.f32 %v1602, %v1603
  %v1605 = vrot.slane %v1604, 2
  %v1606 = vmax.f32 %v1604, %v1605
  %v1607 = vrot.slane %v1606, 1
  %v1608 = vmax.f32 %v1606, %v1607
  %v1609 = vsub.f32 %v355, %v1608
  %v1610 = vsub.f32 %v356, %v1608
  %v1611 = vmul.f32 %v1609, 1.442695
  %v1612 = vpow.pop %v1611
  %v1613 = vmul.f32 %v1610, 1.442695
  %v1614 = vpow.pop %v1613
  %v1617 = vrot.slane %v1612, 6
  %v1618 = vrot.slane %v1614, 6
  %v1619 = vsel %vm373, %v1617, %v1618
  %v1622 = vsel %vm373, %v1618, 0.0
  %v1623 = vadd.f32 %v1619, %v1622
  %v1624 = vrot.slane %v1623, 4
  %v1625 = vadd.f32 %v1623, %v1624
  %v1626 = vrot.slane %v1625, 2
  %v1627 = vadd.f32 %v1625, %v1626
  %v1628 = vrot.slane %v1627, 1
  %v1629 = vadd.f32 %v1627, %v1628
  %v1630 = vlog2.pop %v1629
  %v1631 = vmul.f32 %v1630, 0.6931472
  %v1632 = vsub.f32 %v1631, %v1609
  %v1633 = vsub.f32 %v1631, %v1610
  %v1634 = vmul.f32 %v1599, %v1632
  %v1635 = vmul.f32 %v1600, %v1633
  %v1638 = vrot.slane %v1634, 6
  %v1639 = vrot.slane %v1635, 6
  %v1640 = vsel %vm373, %v1638, %v1639
  %v1643 = vsel %vm373, %v1639, 0.0
  %v1644 = vadd.f32 %v1640, %v1643
  %v1645 = vrot.slane %v1644, 4
  %v1646 = vadd.f32 %v1644, %v1645
  %v1647 = vrot.slane %v1646, 2
  %v1648 = vadd.f32 %v1646, %v1647
  %v1649 = vrot.slane %v1648, 1
  %v1650 = vadd.f32 %v1648, %v1649
  %v1651 = vadd.f32 %v1568, %v1650
  %v1652 = vsel %vm975, %v369, -inf
  %v1653 = vsel %vm977, %v370, -inf
  %v1654 = vmax.f32 %v1652, %v1653
  %v1655 = vrot.slane %v1654, 4
  %v1656 = vmax.f32 %v1654, %v1655
  %v1657 = vrot.slane %v1656, 2
  %v1658 = vmax.f32 %v1656, %v1657
  %v1659 = vrot.slane %v1658, 1
  %v1660 = vmax.f32 %v1658, %v1659
  %v1661 = vsub.f32 %v369, %v1660
  %v1662 = vsub.f32 %v370, %v1660
  %v1663 = vmul.f32 %v1661, 1.442695
  %v1664 = vpow.pop %v1663
  %v1665 = vmul.f32 %v1662, 1.442695
  %v1666 = vpow.pop %v1665
  %v1669 = vrot.slane %v1664, 3
  %v1670 = vrot.slane %v1666, 3
  %v1671 = vsel %vm977, %v1669, %v1670
  %v1674 = vsel %vm373, %v1670, 0.0
  %v1675 = vadd.f32 %v1671, %v1674
  %v1676 = vrot.slane %v1675, 4
  %v1677 = vadd.f32 %v1675, %v1676
  %v1678 = vrot.slane %v1677, 2
  %v1679 = vadd.f32 %v1677, %v1678
  %v1680 = vrot.slane %v1679, 1
  %v1681 = vadd.f32 %v1679, %v1680
  %v1682 = vrcp.pop %v1681
  %v1683 = vmul.f32 %v1664, %v1682
  %v1684 = vmul.f32 %v1666, %v1682
  %v1685 = vsel %vm975, %v356, -inf
  %v1686 = vsel %vm977, %v357, -inf
  %v1687 = vmax.f32 %v1685, %v1686
  %v1688 = vrot.slane %v1687, 4
  %v1689 = vmax.f32 %v1687, %v1688
  %v1690 = vrot.slane %v1689, 2
  %v1691 = vmax.f32 %v1689, %v1690
  %v1692 = vrot.slane %v1691, 1
  %v1693 = vmax.f32 %v1691, %v1692
  %v1694 = vsub.f32 %v356, %v1693
  %v1695 = vsub.f32 %v357, %v1693
  %v1696 = vmul.f32 %v1694, 1.442695
  %v1697 = vpow.pop %v1696
  %v1698 = vmul.f32 %v1695, 1.442695
  %v1699 = vpow.pop %v1698
  %v1702 = vrot.slane %v1697, 3
  %v1703 = vrot.slane %v1699, 3
  %v1704 = vsel %vm977, %v1702, %v1703
  %v1707 = vsel %vm373, %v1703, 0.0
  %v1708 = vadd.f32 %v1704, %v1707
  %v1709 = vrot.slane %v1708, 4
  %v1710 = vadd.f32 %v1708, %v1709
  %v1711 = vrot.slane %v1710, 2
  %v1712 = vadd.f32 %v1710, %v1711
  %v1713 = vrot.slane %v1712, 1
  %v1714 = vadd.f32 %v1712, %v1713
  %v1715 = vlog2.pop %v1714
  %v1716 = vmul.f32 %v1715, 0.6931472
  %v1717 = vsub.f32 %v1716, %v1694
  %v1718 = vsub.f32 %v1716, %v1695
  %v1719 = vmul.f32 %v1683, %v1717
  %v1720 = vmul.f32 %v1684, %v1718
  %v1723 = vrot.slane %v1719, 3
  %v1724 = vrot.slane %v1720, 3
  %v1725 = vsel %vm977, %v1723, %v1724
  %v1728 = vsel %vm373, %v1724, 0.0
  %v1729 = vadd.f32 %v1725, %v1728
  %v1730 = vrot.slane %v1729, 4
  %v1731 = vadd.f32 %v1729, %v1730
  %v1732 = vrot.slane %v1731, 2
  %v1733 = vadd.f32 %v1731, %v1732
  %v1734 = vrot.slane %v1733, 1
  %v1735 = vadd.f32 %v1733, %v1734
  %v1736 = vadd.f32 %v1651, %v1735
  %v1737 = vsel %vm373, %v371, -inf
  %v1738 = vmax.f32 %v370, %v1737
  %v1739 = vrot.slane %v1738, 4
  %v1740 = vmax.f32 %v1738, %v1739
  %v1741 = vrot.slane %v1740, 2
  %v1742 = vmax.f32 %v1740, %v1741
  %v1743 = vrot.slane %v1742, 1
  %v1744 = vmax.f32 %v1742, %v1743
  %v1745 = vsub.f32 %v370, %v1744
  %v1746 = vsub.f32 %v371, %v1744
  %v1747 = vmul.f32 %v1745, 1.442695
  %v1748 = vpow.pop %v1747
  %v1749 = vmul.f32 %v1746, 1.442695
  %v1750 = vpow.pop %v1749
  %v1751 = vsel %vm373, %v1750, 0.0
  %v1752 = vadd.f32 %v1748, %v1751
  %v1753 = vrot.slane %v1752, 4
  %v1754 = vadd.f32 %v1752, %v1753
  %v1755 = vrot.slane %v1754, 2
  %v1756 = vadd.f32 %v1754, %v1755
  %v1757 = vrot.slane %v1756, 1
  %v1758 = vadd.f32 %v1756, %v1757
  %v1759 = vrcp.pop %v1758
  %v1760 = vmul.f32 %v1748, %v1759
  %v1761 = vmul.f32 %v1750, %v1759
  %v1762 = vsel %vm373, %v358, -inf
  %v1763 = vmax.f32 %v357, %v1762
  %v1764 = vrot.slane %v1763, 4
  %v1765 = vmax.f32 %v1763, %v1764
  %v1766 = vrot.slane %v1765, 2
  %v1767 = vmax.f32 %v1765, %v1766
  %v1768 = vrot.slane %v1767, 1
  %v1769 = vmax.f32 %v1767, %v1768
  %v1770 = vsub.f32 %v357, %v1769
  %v1771 = vsub.f32 %v358, %v1769
  %v1772 = vmul.f32 %v1770, 1.442695
  %v1773 = vpow.pop %v1772
  %v1774 = vmul.f32 %v1771, 1.442695
  %v1775 = vpow.pop %v1774
  %v1776 = vsel %vm373, %v1775, 0.0
  %v1777 = vadd.f32 %v1773, %v1776
  %v1778 = vrot.slane %v1777, 4
  %v1779 = vadd.f32 %v1777, %v1778
  %v1780 = vrot.slane %v1779, 2
  %v1781 = vadd.f32 %v1779, %v1780
  %v1782 = vrot.slane %v1781, 1
  %v1783 = vadd.f32 %v1781, %v1782
  %v1784 = vlog2.pop %v1783
  %v1785 = vmul.f32 %v1784, 0.6931472
  %v1786 = vsub.f32 %v1785, %v1770
  %v1787 = vsub.f32 %v1785, %v1771
  %v1788 = vmul.f32 %v1760, %v1786
  %v1789 = vmul.f32 %v1761, %v1787
  %v1790 = vsel %vm373, %v1789, 0.0
  %v1791 = vadd.f32 %v1788, %v1790
  %v1792 = vrot.slane %v1791, 4
  %v1793 = vadd.f32 %v1791, %v1792
  %v1794 = vrot.slane %v1793, 2
  %v1795 = vadd.f32 %v1793, %v1794
  %v1796 = vrot.slane %v1795, 1
  %v1797 = vadd.f32 %v1795, %v1796
  %v1798 = vadd.f32 %v1736, %v1797
  %v1799 = vsel %vm436, %v370, -inf
  %v1800 = vsel %vm438, %v371, -inf
  %v1801 = vmax.f32 %v1799, %v1800
  %v1802 = vrot.slane %v1801, 4
  %v1803 = vmax.f32 %v1801, %v1802
  %v1804 = vrot.slane %v1803, 2
  %v1805 = vmax.f32 %v1803, %v1804
  %v1806 = vrot.slane %v1805, 1
  %v1807 = vmax.f32 %v1805, %v1806
  %v1808 = vsub.f32 %v370, %v1807
  %v1809 = vsub.f32 %v371, %v1807
  %v1810 = vmul.f32 %v1808, 1.442695
  %v1811 = vpow.pop %v1810
  %v1812 = vmul.f32 %v1809, 1.442695
  %v1813 = vpow.pop %v1812
  %v1816 = vrot.slane %v1811, 5
  %v1817 = vrot.slane %v1813, 5
  %v1818 = vsel %vm455, %v1816, %v1817
  %v1821 = vsel %vm373, %v1817, 0.0
  %v1822 = vadd.f32 %v1818, %v1821
  %v1823 = vrot.slane %v1822, 4
  %v1824 = vadd.f32 %v1822, %v1823
  %v1825 = vrot.slane %v1824, 2
  %v1826 = vadd.f32 %v1824, %v1825
  %v1827 = vrot.slane %v1826, 1
  %v1828 = vadd.f32 %v1826, %v1827
  %v1829 = vrcp.pop %v1828
  %v1830 = vmul.f32 %v1811, %v1829
  %v1831 = vmul.f32 %v1813, %v1829
  %v1832 = vsel %vm436, %v357, -inf
  %v1833 = vsel %vm438, %v358, -inf
  %v1834 = vmax.f32 %v1832, %v1833
  %v1835 = vrot.slane %v1834, 4
  %v1836 = vmax.f32 %v1834, %v1835
  %v1837 = vrot.slane %v1836, 2
  %v1838 = vmax.f32 %v1836, %v1837
  %v1839 = vrot.slane %v1838, 1
  %v1840 = vmax.f32 %v1838, %v1839
  %v1841 = vsub.f32 %v357, %v1840
  %v1842 = vsub.f32 %v358, %v1840
  %v1843 = vmul.f32 %v1841, 1.442695
  %v1844 = vpow.pop %v1843
  %v1845 = vmul.f32 %v1842, 1.442695
  %v1846 = vpow.pop %v1845
  %v1849 = vrot.slane %v1844, 5
  %v1850 = vrot.slane %v1846, 5
  %v1851 = vsel %vm455, %v1849, %v1850
  %v1854 = vsel %vm373, %v1850, 0.0
  %v1855 = vadd.f32 %v1851, %v1854
  %v1856 = vrot.slane %v1855, 4
  %v1857 = vadd.f32 %v1855, %v1856
  %v1858 = vrot.slane %v1857, 2
  %v1859 = vadd.f32 %v1857, %v1858
  %v1860 = vrot.slane %v1859, 1
  %v1861 = vadd.f32 %v1859, %v1860
  %v1862 = vlog2.pop %v1861
  %v1863 = vmul.f32 %v1862, 0.6931472
  %v1864 = vsub.f32 %v1863, %v1841
  %v1865 = vsub.f32 %v1863, %v1842
  %v1866 = vmul.f32 %v1830, %v1864
  %v1867 = vmul.f32 %v1831, %v1865
  %v1870 = vrot.slane %v1866, 5
  %v1871 = vrot.slane %v1867, 5
  %v1872 = vsel %vm455, %v1870, %v1871
  %v1875 = vsel %vm373, %v1871, 0.0
  %v1876 = vadd.f32 %v1872, %v1875
  %v1877 = vrot.slane %v1876, 4
  %v1878 = vadd.f32 %v1876, %v1877
  %v1879 = vrot.slane %v1878, 2
  %v1880 = vadd.f32 %v1878, %v1879
  %v1881 = vrot.slane %v1880, 1
  %v1882 = vadd.f32 %v1880, %v1881
  %v1883 = vadd.f32 %v1798, %v1882
  %v1884 = vsel %vm524, %v371, -inf
  %v1885 = vsel %vm526, %v372, -inf
  %v1886 = vmax.f32 %v1884, %v1885
  %v1887 = vrot.slane %v1886, 4
  %v1888 = vmax.f32 %v1886, %v1887
  %v1889 = vrot.slane %v1888, 2
  %v1890 = vmax.f32 %v1888, %v1889
  %v1891 = vrot.slane %v1890, 1
  %v1892 = vmax.f32 %v1890, %v1891
  %v1893 = vsub.f32 %v371, %v1892
  %v1894 = vsub.f32 %v372, %v1892
  %v1895 = vmul.f32 %v1893, 1.442695
  %v1896 = vpow.pop %v1895
  %v1897 = vmul.f32 %v1894, 1.442695
  %v1898 = vpow.pop %v1897
  %v1901 = vrot.slane %v1896, 2
  %v1902 = vrot.slane %v1898, 2
  %v1903 = vsel %vm543, %v1901, %v1902
  %v1906 = vsel %vm373, %v1902, 0.0
  %v1907 = vadd.f32 %v1903, %v1906
  %v1908 = vrot.slane %v1907, 4
  %v1909 = vadd.f32 %v1907, %v1908
  %v1910 = vrot.slane %v1909, 2
  %v1911 = vadd.f32 %v1909, %v1910
  %v1912 = vrot.slane %v1911, 1
  %v1913 = vadd.f32 %v1911, %v1912
  %v1914 = vrcp.pop %v1913
  %v1915 = vmul.f32 %v1896, %v1914
  %v1916 = vmul.f32 %v1898, %v1914
  %v1917 = vsel %vm524, %v358, -inf
  %v1918 = vsel %vm526, %v359, -inf
  %v1919 = vmax.f32 %v1917, %v1918
  %v1920 = vrot.slane %v1919, 4
  %v1921 = vmax.f32 %v1919, %v1920
  %v1922 = vrot.slane %v1921, 2
  %v1923 = vmax.f32 %v1921, %v1922
  %v1924 = vrot.slane %v1923, 1
  %v1925 = vmax.f32 %v1923, %v1924
  %v1926 = vsub.f32 %v358, %v1925
  %v1927 = vsub.f32 %v359, %v1925
  %v1928 = vmul.f32 %v1926, 1.442695
  %v1929 = vpow.pop %v1928
  %v1930 = vmul.f32 %v1927, 1.442695
  %v1931 = vpow.pop %v1930
  %v1934 = vrot.slane %v1929, 2
  %v1935 = vrot.slane %v1931, 2
  %v1936 = vsel %vm543, %v1934, %v1935
  %v1939 = vsel %vm373, %v1935, 0.0
  %v1940 = vadd.f32 %v1936, %v1939
  %v1941 = vrot.slane %v1940, 4
  %v1942 = vadd.f32 %v1940, %v1941
  %v1943 = vrot.slane %v1942, 2
  %v1944 = vadd.f32 %v1942, %v1943
  %v1945 = vrot.slane %v1944, 1
  %v1946 = vadd.f32 %v1944, %v1945
  %v1947 = vlog2.pop %v1946
  %v1948 = vmul.f32 %v1947, 0.6931472
  %v1949 = vsub.f32 %v1948, %v1926
  %v1950 = vsub.f32 %v1948, %v1927
  %v1951 = vmul.f32 %v1915, %v1949
  %v1952 = vmul.f32 %v1916, %v1950
  %v1955 = vrot.slane %v1951, 2
  %v1956 = vrot.slane %v1952, 2
  %v1957 = vsel %vm543, %v1955, %v1956
  %v1960 = vsel %vm373, %v1956, 0.0
  %v1961 = vadd.f32 %v1957, %v1960
  %v1962 = vrot.slane %v1961, 4
  %v1963 = vadd.f32 %v1961, %v1962
  %v1964 = vrot.slane %v1963, 2
  %v1965 = vadd.f32 %v1963, %v1964
  %v1966 = vrot.slane %v1965, 1
  %v1967 = vadd.f32 %v1965, %v1966
  %v1968 = vadd.f32 %v1883, %v1967
  %v1969 = vlaneseq
  %v1970 = vand.u32 %v1969, 127
  %s1971 = smul.u32 0, 128
  %v1972 = vstv %s1971
  %v1973 = vadd.s32 %v1970, %v1972
  %vm1974 = vcmp.lt.s32.totalorder %v1973, 8
  %v1975 = vsel %vm1974, %v1968, 0.0
  %v1976 = vsel %vm614, %v1975, 0.0
  %1977 = vadd.xlane.f32.xlu0 %v1976
  %v1978 = vpop.xlane.xlu0 %1977
  %v1979 = vrot.slane %v1978, 4
  %v1980 = vadd.f32 %v1978, %v1979
  %v1981 = vrot.slane %v1980, 2
  %v1982 = vadd.f32 %v1980, %v1981
  %v1983 = vrot.slane %v1982, 1
  %v1984 = vadd.f32 %v1982, %v1983
  %s1985 = vtos %v1984
  %v1986 = vstv %s1985
  %v1987 = vmul.f32 %v1986, 0.5
  %v1988 = vadd.f32 %v346, %v1987
  %v1989 = vmul.f32 %v1988, 0.125
  %1990 = vst [vmem:[%s4] sm:$0xff] %v1989
  // Predicated region
  $region18: #{pskd_v13_loss.1} parent=0 // pred_check
    _
  $region19: #{pskd_v13_loss.1} parent=0 // pred_check_branch
    %1992 = sbr.rel (0) target = $region21
  $region20: #{pskd_v13_loss.1} parent=0 // pred_region
    _
  $region21: #{pskd_v13_loss.1} parent=0 // pred_fallthru
    _
  // Predicated region
  $region22: #{pskd_v13_loss.1} parent=0 // pred_check
    _
  $region23: #{pskd_v13_loss.1} parent=0 // pred_check_branch
    %1994 = sbr.rel (0) target = $region25
  $region24: #{pskd_v13_loss.1} parent=0 // pred_region
    _
  $region25: #{pskd_v13_loss.1} parent=0 // pred_fallthru
    _

</llo_original>
